<compile_context>
chip_gen: v7x
topology: tpu7x:2x2x1
jax: 0.10.0
libtpu: 0.0.40
codegen_flags: <defaults>
</compile_context>

<pallas_src>
import jax
import jax.numpy as jnp
from jax.experimental import pallas as pl
from jax.experimental.pallas import tpu as pltpu


GROUPS = [[0, 1, 2, 3, 4, 5, 6, 7]]   # self.groups in the PyTorch module


# --------------------------------------------------------------------------
# Kernel
# --------------------------------------------------------------------------
def _agg_level_kernel(x_ref, w_ref, b_ref, o_ref):
    """One spatial tile of one batch element.

    x_ref : (Tg*Cin, tm)       io_dtype  -- group images' channels stacked
    w_ref : (Tg*Cout, Tg*Cin)  io_dtype  -- block-diagonal 1x1-conv weight
    b_ref : (Cout, 1)          f32
    o_ref : (Cout, tm)         out_dtype
    """
    cout = o_ref.shape[0]
    tg = w_ref.shape[0] // cout

    # One wide MXU matmul (K = Tg*Cin, M = Tg*Cout) instead of Tg tiny dots.
    acc = jnp.dot(w_ref[...], x_ref[...], preferred_element_type=jnp.float32)

    # Max over the Tg images: rows of acc are [img0: Cout | img1: Cout | ...];
    # every slice boundary is a multiple of Cout (>= 32) -> 8-sublane aligned.
    red = acc[:cout, :]
    for t in range(1, tg):                       # static unroll, Tg <= 8
        red = jnp.maximum(red, acc[t * cout:(t + 1) * cout, :])

    # relu(max_t(w.x_t) + b) == max_t relu(w.x_t + b): shared bias, monotone relu.
    o_ref[...] = jnp.maximum(red + b_ref[...], 0.0).astype(o_ref.dtype)


# --------------------------------------------------------------------------
# Tile / VMEM budgeting
# --------------------------------------------------------------------------
def _vmem_capacity_bytes():
    try:
        cap = getattr(pltpu.get_tpu_info(), "vmem_capacity_bytes", None)
        if cap:
            return int(cap)
    except Exception:
        pass
    return 64 << 20          # conservative fallback (v7x has the smallest VMEM)


def _choose_tile(L, tc, cout, tg, in_bytes, out_bytes, n_batch):
    """Largest lane-dense spatial tile that (a) divides the 128-padded spatial
    extent (so padding is < 128 columns), (b) fits the per-generation VMEM
    budget with double-buffered in/out blocks plus the (Tg*Cout, tm) matmul
    intermediate, and (c) keeps >= 4 total grid steps where possible so each
    v7x TensorCore still gets a pipelined loop."""
    L128 = pl.cdiv(L, 128) * 128
    nblk = L128 // 128
    budget = min(_vmem_capacity_bytes() // 2, 28 << 20)
    per_col = 2 * tc * in_bytes + 2 * cout * out_bytes + tg * cout * 4
    tm_cap = min(16384, max(128, (budget // per_col) // 128 * 128))
    cands = [128 * d for d in range(1, nblk + 1)
             if nblk % d == 0 and 128 * d <= tm_cap] or [128]
    good = [t for t in cands if n_batch * (L128 // t) >= 4]
    return (max(good) if good else max(cands)), L128


# --------------------------------------------------------------------------
# Per-level wrapper
# --------------------------------------------------------------------------
def aggregate_level(x_g, w_blk, b, cout, *, out_dtype=jnp.float32):
    """x_g: [N, Tg*Cin, L] (group images' channels stacked, NCHW-flat).
    w_blk: [Tg*Cout, Tg*Cin] block-diagonal weight.  b: [Cout, 1] (f32).

    Returns [N, Cout, L] = max over the Tg images of relu(w @ x_img + b).
    """
    N, TC, L = x_g.shape
    tg = w_blk.shape[0] // cout
    tm, Lp = _choose_tile(L, TC, cout, tg,
                          x_g.dtype.itemsize, jnp.dtype(out_dtype).itemsize, N)
    if Lp != L:
        # tm divides Lp, so only the ragged remainder (< 128 columns) is padded.
        x_g = jnp.pad(x_g, ((0, 0), (0, 0), (0, Lp - L)))

    out = pl.pallas_call(
        _agg_level_kernel,
        out_shape=jax.ShapeDtypeStruct((N, cout, Lp), out_dtype),
        grid_spec=pltpu.PrefetchScalarGridSpec(
            num_scalar_prefetch=0,
            grid=(N, Lp // tm),
            in_specs=[
                # batch dim squeezed; (Tg*Cin, tm) streamed per tile.
                pl.BlockSpec((None, TC, tm), lambda n, i: (n, 0, i)),
                # tiny, stays resident across grid steps.
                pl.BlockSpec(w_blk.shape, lambda n, i: (0, 0)),
                pl.BlockSpec((cout, 1), lambda n, i: (0, 0)),
            ],
            out_specs=pl.BlockSpec((None, cout, tm), lambda n, i: (n, 0, i)),
        ),
        compiler_params=pltpu.CompilerParams(
            # fully data-parallel grid: T-max is fused inside the kernel.
            dimension_semantics=("parallel", "parallel"),
            vmem_limit_bytes=int(min(_vmem_capacity_bytes() * 3 // 4, 100 << 20)),
        ),
    )(x_g, w_blk, b)

    if Lp != L:
        out = out[:, :, :L]
    return out


# --------------------------------------------------------------------------
# Full forward (all levels / groups)
# --------------------------------------------------------------------------
def aggregation_backbone_forward(x, image_channels, level_params,
                                 io_dtype=jnp.float32, out_dtype=jnp.float32):
    """x: NCHW [N, T*image_channels, H, W].

    level_params: list of (stride, cout, w, b) -- one synthetic backbone level
    each, mirroring backbone.out_channels = [(stride, cout), ...].
    Returns a list of NCHW feature maps [N, ngroups*cout, H//stride, W//stride].
    """
    N, CT, H, W = x.shape
    T = CT // image_channels

    # Chain spatial subsamples: stride-4 is taken from the stride-2 result, so
    # deeper levels never re-read the full-resolution x.
    subsampled = {1: x}
    outputs = []
    for stride, cout, w, b in level_params:
        if stride not in subsampled:
            base = max(s for s in subsampled if stride % s == 0)
            f = stride // base
            subsampled[stride] = subsampled[base][:, :, ::f, ::f]
        xs = subsampled[stride]
        Hs, Ws = xs.shape[2], xs.shape[3]
        # NCHW is channel-major: flattening spatial is a free row-major reshape.
        xs_flat = xs.reshape(N, CT, Hs * Ws)

        wT = jnp.transpose(w).astype(jnp.float32)      # (Cout, Cin)
        b2 = b.reshape(cout, 1).astype(jnp.float32)

        group_outs = []
        for group in GROUPS:
            idxs = [i for i in group if i < T]
            tg = len(idxs)
            if idxs == list(range(tg)):
                # common case: contiguous prefix of images -> plain channel slice.
                x_g = xs_flat[:, : tg * image_channels, :]
            else:
                # TODO(synk): this gather materializes a copy in HBM; if it is
                # ever hot, move it into the kernel via scalar-prefetched offsets.
                ch = jnp.asarray([i * image_channels + c
                                  for i in idxs for c in range(image_channels)])
                x_g = jnp.take(xs_flat, ch, axis=1)

            # Block-diagonal weight: one wide MXU matmul per tile instead of Tg
            # tiny K=Cin dots (~64 KiB f32, built once, resident in VMEM).
            w_blk = jnp.kron(jnp.eye(tg, dtype=jnp.float32), wT)

            agg = aggregate_level(x_g.astype(io_dtype), w_blk.astype(io_dtype),
                                  b2, cout, out_dtype=out_dtype)
            group_outs.append(agg.reshape(N, cout, Hs, Ws))
        outputs.append(jnp.concatenate(group_outs, axis=1))
    return outputs


# --------------------------------------------------------------------------
# Pure-JAX reference (replicates the PyTorch forward semantics)
# --------------------------------------------------------------------------
def reference_forward(x, image_channels, level_params):
    N, CT, H, W = x.shape
    T = CT // image_channels
    all_features = []
    for i in range(T):
        xi = x[:, i * image_channels:(i + 1) * image_channels, :, :]
        feats = []
        for stride, cout, w, b in level_params:
            xs = xi[:, :, ::stride, ::stride]
            f = jnp.einsum('nchw,cd->ndhw', xs, w) + b.reshape(1, cout, 1, 1)
            feats.append(jnp.maximum(f, 0.0))
        all_features.append(feats)
    out = []
    for feature_idx in range(len(all_features[0])):
        aggregated = []
        for group in GROUPS:
            gf = [all_features[j][feature_idx] for j in group if j < T]
            aggregated.append(jnp.max(jnp.stack(gf, axis=0), axis=0))
        out.append(jnp.concatenate(aggregated, axis=1))
    return out


if __name__ == "__main__":
    key = jax.random.PRNGKey(0)
    N, image_channels, T, H, W = 2, 4, 8, 16, 16
    # synthetic backbone.out_channels = [(downsample, channels), ...]
    backbone_out_channels = [(2, 32), (4, 64)]

    k_x, *k_params = jax.random.split(key, 1 + 2 * len(backbone_out_channels))
    x = jax.random.normal(k_x, (N, T * image_channels, H, W), dtype=jnp.float32)

    level_params = []
    for li, (stride, cout) in enumerate(backbone_out_channels):
        kw, kb = k_params[2 * li], k_params[2 * li + 1]
        w = jax.random.normal(kw, (image_channels, cout), dtype=jnp.float32) * 0.1
        b = jax.random.normal(kb, (1, cout), dtype=jnp.float32) * 0.1
        level_params.append((stride, cout, w, b))

    refs = reference_forward(x, image_channels, level_params)

    # f32 I/O: exact (tight-tolerance) match against the reference.
    fwd = jax.jit(lambda xx: aggregation_backbone_forward(
        xx, image_channels, level_params))
    outs = [jax.block_until_ready(o) for o in fwd(x)]
    for o, r in zip(outs, refs):
        assert o.shape == r.shape, (o.shape, r.shape)
        assert jnp.allclose(o, r, atol=1e-4, rtol=1e-4), \
            float(jnp.max(jnp.abs(o - r)))

    # bf16 I/O (halves the HBM streams on mem-bound levels); accumulation and
    # max/bias/relu stay in f32 inside the kernel -> loose tolerance only.
    fwd_bf16 = jax.jit(lambda xx: aggregation_backbone_forward(
        xx, image_channels, level_params,
        io_dtype=jnp.bfloat16, out_dtype=jnp.bfloat16))
    outs_bf = [jax.block_until_ready(o) for o in fwd_bf16(x)]
    for o, r in zip(outs_bf, refs):
        assert o.shape == r.shape, (o.shape, r.shape)
        err = float(jnp.max(jnp.abs(o.astype(jnp.float32) - r)))
        assert jnp.allclose(o.astype(jnp.float32), r, atol=5e-2, rtol=5e-2), err

    print("KERNEL_OK")
</pallas_src>

<mosaic_0001>
module attributes {stable_mosaic.version = 11 : i64} {
  func.func @_agg_level_kernel(%arg0: i32, %arg1: i32, %arg2: memref<1x32x128xf32, #tpu.memory_space<vmem>>, %arg3: memref<256x32xf32, #tpu.memory_space<vmem>>, %arg4: memref<32x1xf32, #tpu.memory_space<vmem>>, %arg5: memref<1x32x128xf32, #tpu.memory_space<vmem>>) attributes {dimension_semantics = [#tpu.dimension_semantics<parallel>, #tpu.dimension_semantics<parallel>], iteration_bounds = array<i64: 2, 1>, scalar_prefetch = 0 : i64, scratch_operands = 0 : i64, tpu.core_type = #tpu.core_type<tc>, window_params = [{transform_indices = @transform_0, window_bounds = array<i64: 1, 32, 128>}, {pipeline_mode = #tpu.pipeline_mode<synchronous>, transform_indices = @transform_1, window_bounds = array<i64: 256, 32>}, {pipeline_mode = #tpu.pipeline_mode<synchronous>, transform_indices = @transform_2, window_bounds = array<i64: 32, 1>}, {transform_indices = @transform_3, window_bounds = array<i64: 1, 32, 128>}]} {
    %c0 = arith.constant 0 : index
    %c0_0 = arith.constant 0 : index
    %0 = vector.load %arg3[%c0, %c0_0] : memref<256x32xf32, #tpu.memory_space<vmem>>, vector<256x32xf32>
    %c0_1 = arith.constant 0 : index
    %c0_2 = arith.constant 0 : index
    %c0_3 = arith.constant 0 : index
    %1 = vector.load %arg2[%c0_1, %c0_2, %c0_3] : memref<1x32x128xf32, #tpu.memory_space<vmem>>, vector<1x32x128xf32>
    %2 = vector.shape_cast %1 : vector<1x32x128xf32> to vector<32x128xf32>
    %cst = arith.constant dense<0.000000e+00> : vector<256x128xf32>
    %3 = tpu.matmul %0, %2, %cst {dimension_numbers = #tpu.dot_dimension_numbers<[1], [0], [0], [1], [0, 0, 1, 1], [], []>} : vector<256x32xf32>, vector<32x128xf32>, vector<256x128xf32> -> vector<256x128xf32>
    %4 = vector.extract_strided_slice %3 {offsets = [0, 0], sizes = [32, 128], strides = [1, 1]} : vector<256x128xf32> to vector<32x128xf32>
    %5 = vector.extract_strided_slice %3 {offsets = [32, 0], sizes = [32, 128], strides = [1, 1]} : vector<256x128xf32> to vector<32x128xf32>
    %6 = arith.maximumf %4, %5 : vector<32x128xf32>
    %7 = vector.extract_strided_slice %3 {offsets = [64, 0], sizes = [32, 128], strides = [1, 1]} : vector<256x128xf32> to vector<32x128xf32>
    %8 = arith.maximumf %6, %7 : vector<32x128xf32>
    %9 = vector.extract_strided_slice %3 {offsets = [96, 0], sizes = [32, 128], strides = [1, 1]} : vector<256x128xf32> to vector<32x128xf32>
    %10 = arith.maximumf %8, %9 : vector<32x128xf32>
    %11 = vector.extract_strided_slice %3 {offsets = [128, 0], sizes = [32, 128], strides = [1, 1]} : vector<256x128xf32> to vector<32x128xf32>
    %12 = arith.maximumf %10, %11 : vector<32x128xf32>
    %13 = vector.extract_strided_slice %3 {offsets = [160, 0], sizes = [32, 128], strides = [1, 1]} : vector<256x128xf32> to vector<32x128xf32>
    %14 = arith.maximumf %12, %13 : vector<32x128xf32>
    %15 = vector.extract_strided_slice %3 {offsets = [192, 0], sizes = [32, 128], strides = [1, 1]} : vector<256x128xf32> to vector<32x128xf32>
    %16 = arith.maximumf %14, %15 : vector<32x128xf32>
    %17 = vector.extract_strided_slice %3 {offsets = [224, 0], sizes = [32, 128], strides = [1, 1]} : vector<256x128xf32> to vector<32x128xf32>
    %18 = arith.maximumf %16, %17 : vector<32x128xf32>
    %c0_4 = arith.constant 0 : index
    %c0_5 = arith.constant 0 : index
    %19 = vector.load %arg4[%c0_4, %c0_5] : memref<32x1xf32, #tpu.memory_space<vmem>>, vector<32x1xf32>
    %20 = vector.broadcast %19 : vector<32x1xf32> to vector<32x128xf32>
    %21 = arith.addf %18, %20 : vector<32x128xf32>
    %cst_6 = arith.constant 0.000000e+00 : f32
    %22 = vector.broadcast %cst_6 : f32 to vector<32x128xf32>
    %23 = arith.maximumf %21, %22 : vector<32x128xf32>
    %c0_7 = arith.constant 0 : index
    %c0_8 = arith.constant 0 : index
    %c0_9 = arith.constant 0 : index
    %24 = vector.load %arg5[%c0_7, %c0_8, %c0_9] : memref<1x32x128xf32, #tpu.memory_space<vmem>>, vector<1x32x128xf32>
    %25 = vector.shape_cast %24 : vector<1x32x128xf32> to vector<32x128xf32>
    %26 = vector.shape_cast %23 : vector<32x128xf32> to vector<1x32x128xf32>
    tpu.vector_store %arg5[%c0_7, %c0_8, %c0_9], %26 {strides = array<i32>} : memref<1x32x128xf32, #tpu.memory_space<vmem>>, vector<1x32x128xf32>,
    return
  }
  func.func @transform_0(%arg0: i32, %arg1: i32) -> (i32, i32, i32) {
    %c0_i32 = arith.constant 0 : i32
    %c0_i32_0 = arith.constant 0 : i32
    return %arg0, %c0_i32, %arg1 : i32, i32, i32
  }
  func.func @transform_1(%arg0: i32, %arg1: i32) -> (i32, i32) {
    %c0_i32 = arith.constant 0 : i32
    %c0_i32_0 = arith.constant 0 : i32
    %c0_i32_1 = arith.constant 0 : i32
    return %c0_i32, %c0_i32_0 : i32, i32
  }
  func.func @transform_2(%arg0: i32, %arg1: i32) -> (i32, i32) {
    %c0_i32 = arith.constant 0 : i32
    %c0_i32_0 = arith.constant 0 : i32
    %c0_i32_1 = arith.constant 0 : i32
    return %c0_i32, %c0_i32_0 : i32, i32
  }
  func.func @transform_3(%arg0: i32, %arg1: i32) -> (i32, i32, i32) {
    %c0_i32 = arith.constant 0 : i32
    %c0_i32_0 = arith.constant 0 : i32
    return %arg0, %c0_i32, %arg1 : i32, i32, i32
  }
}

module attributes {stable_mosaic.version = 11 : i64} {
  func.func @_agg_level_kernel(%arg0: i32, %arg1: i32, %arg2: memref<1x32x128xf32, #tpu.memory_space<vmem>>, %arg3: memref<512x32xf32, #tpu.memory_space<vmem>>, %arg4: memref<64x1xf32, #tpu.memory_space<vmem>>, %arg5: memref<1x64x128xf32, #tpu.memory_space<vmem>>) attributes {dimension_semantics = [#tpu.dimension_semantics<parallel>, #tpu.dimension_semantics<parallel>], iteration_bounds = array<i64: 2, 1>, scalar_prefetch = 0 : i64, scratch_operands = 0 : i64, tpu.core_type = #tpu.core_type<tc>, window_params = [{transform_indices = @transform_0, window_bounds = array<i64: 1, 32, 128>}, {pipeline_mode = #tpu.pipeline_mode<synchronous>, transform_indices = @transform_1, window_bounds = array<i64: 512, 32>}, {pipeline_mode = #tpu.pipeline_mode<synchronous>, transform_indices = @transform_2, window_bounds = array<i64: 64, 1>}, {transform_indices = @transform_3, window_bounds = array<i64: 1, 64, 128>}]} {
    %c0 = arith.constant 0 : index
    %c0_0 = arith.constant 0 : index
    %0 = vector.load %arg3[%c0, %c0_0] : memref<512x32xf32, #tpu.memory_space<vmem>>, vector<512x32xf32>
    %c0_1 = arith.constant 0 : index
    %c0_2 = arith.constant 0 : index
    %c0_3 = arith.constant 0 : index
    %1 = vector.load %arg2[%c0_1, %c0_2, %c0_3] : memref<1x32x128xf32, #tpu.memory_space<vmem>>, vector<1x32x128xf32>
    %2 = vector.shape_cast %1 : vector<1x32x128xf32> to vector<32x128xf32>
    %cst = arith.constant dense<0.000000e+00> : vector<512x128xf32>
    %3 = tpu.matmul %0, %2, %cst {dimension_numbers = #tpu.dot_dimension_numbers<[1], [0], [0], [1], [0, 0, 1, 1], [], []>} : vector<512x32xf32>, vector<32x128xf32>, vector<512x128xf32> -> vector<512x128xf32>
    %4 = vector.extract_strided_slice %3 {offsets = [0, 0], sizes = [64, 128], strides = [1, 1]} : vector<512x128xf32> to vector<64x128xf32>
    %5 = vector.extract_strided_slice %3 {offsets = [64, 0], sizes = [64, 128], strides = [1, 1]} : vector<512x128xf32> to vector<64x128xf32>
    %6 = arith.maximumf %4, %5 : vector<64x128xf32>
    %7 = vector.extract_strided_slice %3 {offsets = [128, 0], sizes = [64, 128], strides = [1, 1]} : vector<512x128xf32> to vector<64x128xf32>
    %8 = arith.maximumf %6, %7 : vector<64x128xf32>
    %9 = vector.extract_strided_slice %3 {offsets = [192, 0], sizes = [64, 128], strides = [1, 1]} : vector<512x128xf32> to vector<64x128xf32>
    %10 = arith.maximumf %8, %9 : vector<64x128xf32>
    %11 = vector.extract_strided_slice %3 {offsets = [256, 0], sizes = [64, 128], strides = [1, 1]} : vector<512x128xf32> to vector<64x128xf32>
    %12 = arith.maximumf %10, %11 : vector<64x128xf32>
    %13 = vector.extract_strided_slice %3 {offsets = [320, 0], sizes = [64, 128], strides = [1, 1]} : vector<512x128xf32> to vector<64x128xf32>
    %14 = arith.maximumf %12, %13 : vector<64x128xf32>
    %15 = vector.extract_strided_slice %3 {offsets = [384, 0], sizes = [64, 128], strides = [1, 1]} : vector<512x128xf32> to vector<64x128xf32>
    %16 = arith.maximumf %14, %15 : vector<64x128xf32>
    %17 = vector.extract_strided_slice %3 {offsets = [448, 0], sizes = [64, 128], strides = [1, 1]} : vector<512x128xf32> to vector<64x128xf32>
    %18 = arith.maximumf %16, %17 : vector<64x128xf32>
    %c0_4 = arith.constant 0 : index
    %c0_5 = arith.constant 0 : index
    %19 = vector.load %arg4[%c0_4, %c0_5] : memref<64x1xf32, #tpu.memory_space<vmem>>, vector<64x1xf32>
    %20 = vector.broadcast %19 : vector<64x1xf32> to vector<64x128xf32>
    %21 = arith.addf %18, %20 : vector<64x128xf32>
    %cst_6 = arith.constant 0.000000e+00 : f32
    %22 = vector.broadcast %cst_6 : f32 to vector<64x128xf32>
    %23 = arith.maximumf %21, %22 : vector<64x128xf32>
    %c0_7 = arith.constant 0 : index
    %c0_8 = arith.constant 0 : index
    %c0_9 = arith.constant 0 : index
    %24 = vector.load %arg5[%c0_7, %c0_8, %c0_9] : memref<1x64x128xf32, #tpu.memory_space<vmem>>, vector<1x64x128xf32>
    %25 = vector.shape_cast %24 : vector<1x64x128xf32> to vector<64x128xf32>
    %26 = vector.shape_cast %23 : vector<64x128xf32> to vector<1x64x128xf32>
    tpu.vector_store %arg5[%c0_7, %c0_8, %c0_9], %26 {strides = array<i32>} : memref<1x64x128xf32, #tpu.memory_space<vmem>>, vector<1x64x128xf32>,
    return
  }
  func.func @transform_0(%arg0: i32, %arg1: i32) -> (i32, i32, i32) {
    %c0_i32 = arith.constant 0 : i32
    %c0_i32_0 = arith.constant 0 : i32
    return %arg0, %c0_i32, %arg1 : i32, i32, i32
  }
  func.func @transform_1(%arg0: i32, %arg1: i32) -> (i32, i32) {
    %c0_i32 = arith.constant 0 : i32
    %c0_i32_0 = arith.constant 0 : i32
    %c0_i32_1 = arith.constant 0 : i32
    return %c0_i32, %c0_i32_0 : i32, i32
  }
  func.func @transform_2(%arg0: i32, %arg1: i32) -> (i32, i32) {
    %c0_i32 = arith.constant 0 : i32
    %c0_i32_0 = arith.constant 0 : i32
    %c0_i32_1 = arith.constant 0 : i32
    return %c0_i32, %c0_i32_0 : i32, i32
  }
  func.func @transform_3(%arg0: i32, %arg1: i32) -> (i32, i32, i32) {
    %c0_i32 = arith.constant 0 : i32
    %c0_i32_0 = arith.constant 0 : i32
    return %arg0, %c0_i32, %arg1 : i32, i32, i32
  }
}

</mosaic_0001>

<llo_original>
// kernel: _lambda_.2
$region0: #{_lambda_.2}
  #allocation0 [shape = 'u32[]', space=smem, size = 0x4, offset = 0x4, fixed_abs, tag = 'smem constant byte address 0x4 - core index']
  #allocation1 [shape = 'u32[144,128]{1,0:T(1,128)}', space=vmem, size = 0x12000, scoped, tag = 'internal scratch']
  %s0 = inlined_call_operand.vmem [shape: f32[2,32,128], index: 0, kind: input, shape index: {}]
  %s1 = inlined_call_operand.vmem [shape: f32[256,32], index: 1, kind: input, shape index: {}]
  %s2 = inlined_call_operand.vmem [shape: f32[32,1], index: 2, kind: input, shape index: {}]
  %s3 = inlined_call_operand.vmem [shape: f32[2,32,128], index: 3, kind: output, shape index: {}]
  %s4 = sld [smem:[#allocation0]]
  $region45: #{_lambda_.2} parent=0
    _
  %s6 = ssub.s32 1, %s4
  %s7 = scalar_select 0, %s6, %s4
  loop: start=0, step=1, limit=4
  $region2: #{_lambda_.2} parent=0 // loop_pre_header
    _
  $region3: #{_lambda_.2} parent=0 // loop_header
    %s9 = sphi 0, %s13
    %p10 = scmp.ge.s32.totalorder %s9, 4
    %s16 = sphi 0, %s28
    %s17 = sphi 0, %s24
    %s18 = sphi 0, %s16
    %s19 = sphi 0, %s17
    %s20 = sphi 0, %s18
    %s21 = sphi 0, %s19
    %s33 = sphi 0, %s35
    %s36 = sphi 0, %s33
    %s37 = sphi 0, %s36
    %s53 = sphi 0, %s37
    %s57 = sphi 0, %s57
    %s59 = sphi 0, %s57
    %s60 = sphi 0, %s59
    %s74 = sphi 0, %s60
    %s78 = sphi 0, %s78
    %s80 = sphi 0, %s78
    %s81 = sphi 0, %s80
    %s95 = sphi 0, %s81
    %s103 = sphi 0, %s105
    %s106 = sphi 0, %s103
    %s107 = sphi 0, %s106
    %s123 = sphi 0, %s107
  $region4: #{_lambda_.2} parent=0 // loop_header_branch
    %12 = sbr.rel (%p10) target = $region8
  $region5: #{_lambda_.2} parent=0 // loop_body
    %s14 = ssub.s32 %s9, 1
    %s15 = ssub.s32 %s9, 2
    %s22 = sadd.s32 1, %s17
    %p23 = scmp.ge.s32.totalorder %s22, 1
    %s24 = scalar_select %p23, 0, %s22
    %s25 = sadd.s32 1, %s16
    %s26 = scalar_select %p23, %s25, %s16
    %p27 = scmp.ge.s32.totalorder %s26, 2
    %s28 = scalar_select %p27, 0, %s26
    %s29 = ssub.s32 %s16, %s28
    %s30 = ssub.s32 %s17, %s24
    %s31 = sor.u32 %s29, %s30
    %p32 = scmp.eq.s32.totalorder %s31, 0
    %s34 = sadd.s32 %s33, 1
    %s35 = scalar_select %p32, %s33, %s34
    %p38 = pneg %p32
    %p39 = scmp.eq.s32.totalorder %s9, 1
    %p40 = por %p38, %p39
    %p41 = scmp.ne.s32.totalorder %s33, %s36
    %p42 = scmp.eq.s32.totalorder %s9, 0
    %p43 = por %p41, %p42
    %p44 = scmp.ne.s32.totalorder %s33, %s36
    %p45 = scmp.eq.s32.totalorder %s14, 1
    %p46 = por %p44, %p45
    %p47 = scmp.ne.s32.totalorder %s36, %s37
    %p48 = scmp.eq.s32.totalorder %s14, 0
    %p49 = por %p47, %p48
    %p50 = scmp.ne.s32.totalorder %s36, %s37
    %p51 = scmp.eq.s32.totalorder %s15, 1
    %p52 = por %p50, %p51
    %p54 = scmp.ne.s32.totalorder %s37, %s53
    %p55 = scmp.eq.s32.totalorder %s15, 0
    %p56 = por %p54, %p55
    %s58 = sadd.s32 %s57, 1
    %p61 = scmp.eq.s32.totalorder %s9, 1
    %p62 = scmp.ne.s32.totalorder %s57, %s59
    %p63 = scmp.eq.s32.totalorder %s9, 0
    %p64 = por %p62, %p63
    %p65 = scmp.ne.s32.totalorder %s57, %s59
    %p66 = scmp.eq.s32.totalorder %s14, 1
    %p67 = por %p65, %p66
    %p68 = scmp.ne.s32.totalorder %s59, %s60
    %p69 = scmp.eq.s32.totalorder %s14, 0
    %p70 = por %p68, %p69
    %p71 = scmp.ne.s32.totalorder %s59, %s60
    %p72 = scmp.eq.s32.totalorder %s15, 1
    %p73 = por %p71, %p72
    %p75 = scmp.ne.s32.totalorder %s60, %s74
    %p76 = scmp.eq.s32.totalorder %s15, 0
    %p77 = por %p75, %p76
    %s79 = sadd.s32 %s78, 1
    %p82 = scmp.eq.s32.totalorder %s9, 1
    %p83 = scmp.ne.s32.totalorder %s78, %s80
    %p84 = scmp.eq.s32.totalorder %s9, 0
    %p85 = por %p83, %p84
    %p86 = scmp.ne.s32.totalorder %s78, %s80
    %p87 = scmp.eq.s32.totalorder %s14, 1
    %p88 = por %p86, %p87
    %p89 = scmp.ne.s32.totalorder %s80, %s81
    %p90 = scmp.eq.s32.totalorder %s14, 0
    %p91 = por %p89, %p90
    %p92 = scmp.ne.s32.totalorder %s80, %s81
    %p93 = scmp.eq.s32.totalorder %s15, 1
    %p94 = por %p92, %p93
    %p96 = scmp.ne.s32.totalorder %s81, %s95
    %p97 = scmp.eq.s32.totalorder %s15, 0
    %p98 = por %p96, %p97
    %s99 = ssub.s32 %s16, %s28
    %s100 = ssub.s32 %s17, %s24
    %s101 = sor.u32 %s99, %s100
    %p102 = scmp.eq.s32.totalorder %s101, 0
    %s104 = sadd.s32 %s103, 1
    %s105 = scalar_select %p102, %s103, %s104
    %p108 = pneg %p102
    %p109 = scmp.eq.s32.totalorder %s9, 1
    %p110 = por %p108, %p109
    %p111 = scmp.ne.s32.totalorder %s103, %s106
    %p112 = scmp.eq.s32.totalorder %s9, 0
    %p113 = por %p111, %p112
    %p114 = scmp.ne.s32.totalorder %s103, %s106
    %p115 = scmp.eq.s32.totalorder %s14, 1
    %p116 = por %p114, %p115
    %p117 = scmp.ne.s32.totalorder %s106, %s107
    %p118 = scmp.eq.s32.totalorder %s14, 0
    %p119 = por %p117, %p118
    %p120 = scmp.ne.s32.totalorder %s106, %s107
    %p121 = scmp.eq.s32.totalorder %s15, 1
    %p122 = por %p120, %p121
    %p124 = scmp.ne.s32.totalorder %s107, %s123
    %p125 = scmp.eq.s32.totalorder %s15, 0
    %p126 = por %p124, %p125
    %p127 = scmp.le.s32.totalorder 1, %s9
    %p128 = scmp.lt.s32.totalorder %s9, 3
    %p129 = pnand %p127, %p128
    %p130 = pneg %p129
    // Predicated region
    $region9: #{_lambda_.2} parent=5 // pred_check
      _
    $region10: #{_lambda_.2} parent=5 // pred_check_branch
      %132 = sbr.rel (%p129) target = $region12
    $region11: #{_lambda_.2} parent=5 // pred_region
      %s133 = ssub.s32 %s9, 1
      // Predicated region
      $region13: #{_lambda_.2} parent=11 // pred_check
        %p134 = pneg %p70
      $region14: #{_lambda_.2} parent=11 // pred_check_branch
        %136 = sbr.rel (%p134) target = $region16
      $region15: #{_lambda_.2} parent=11 // pred_region
        _
      $region16: #{_lambda_.2} parent=11 // pred_fallthru
        _
      // Predicated region
      $region17: #{_lambda_.2} parent=11 // pred_check
        %p137 = pneg %p91
      $region18: #{_lambda_.2} parent=11 // pred_check_branch
        %139 = sbr.rel (%p137) target = $region20
      $region19: #{_lambda_.2} parent=11 // pred_region
        _
      $region20: #{_lambda_.2} parent=11 // pred_fallthru
        _
    $region12: #{_lambda_.2} parent=5 // pred_fallthru
      _
    %p140 = scmp.lt.s32.totalorder %s9, 2
    // Predicated region
    $region21: #{_lambda_.2} parent=5 // pred_check
      %p141 = pneg %p140
    $region22: #{_lambda_.2} parent=5 // pred_check_branch
      %143 = sbr.rel (%p141) target = $region24
    $region23: #{_lambda_.2} parent=5 // pred_region
      // Predicated region
      $region25: #{_lambda_.2} parent=23 // pred_check
        %p144 = pneg %p43
      $region26: #{_lambda_.2} parent=23 // pred_check_branch
        %146 = sbr.rel (%p144) target = $region28
      $region27: #{_lambda_.2} parent=23 // pred_region
        %p147 = scmp.lt.s32.totalorder %s16, 1
        %s148 = scalar_select %p147, %s16, 1
        %p149 = scmp.lt.s32.totalorder %s17, 0
        %s150 = scalar_select %p149, %s17, 0
        %s151 = smul.addr %s148, 4
        %s152 = sadd.s32 %s150, %s151
        %s153 = smul.addr %s152, 8
        %s154 = scalar_lea.vmem %s0, %s153
      $region28: #{_lambda_.2} parent=23 // pred_fallthru
        _
    $region24: #{_lambda_.2} parent=5 // pred_fallthru
      _
    %p155 = scmp.le.s32.totalorder 1, %s9
    %p156 = scmp.lt.s32.totalorder %s9, 3
    %p157 = pnand %p155, %p156
    %p158 = pneg %p157
    // Predicated region
    $region29: #{_lambda_.2} parent=5 // pred_check
      _
    $region30: #{_lambda_.2} parent=5 // pred_check_branch
      %160 = sbr.rel (%p157) target = $region32
    $region31: #{_lambda_.2} parent=5 // pred_region
      %s161 = ssub.s32 %s9, 1
      %p162 = scmp.lt.s32.totalorder %s18, 1
      %s163 = scalar_select %p162, %s18, 1
      %p164 = scmp.lt.s32.totalorder %s19, 0
      %s165 = scalar_select %p164, %s19, 0
      %s166 = smul.addr %s163, 4
      %s167 = sadd.s32 %s165, %s166
      %s168 = smul.addr %s167, 8
      %s169 = scalar_lea.vmem %s0, %s168
      %p170 = pneg %p49
      %p171 = pneg %p46
      %p172 = pneg %p70
      %p173 = pneg %p67
      %p174 = pneg %p91
      %p175 = pneg %p88
      %p176 = pneg %p119
      %p177 = pneg %p116
      %p178 = scmp.lt.s32.totalorder %s18, 1
      %s179 = scalar_select %p178, %s18, 1
      %p180 = scmp.lt.s32.totalorder %s19, 0
      %s181 = scalar_select %p180, %s19, 0
      %s182 = smul.addr %s179, 4
      %s183 = sadd.s32 %s181, %s182
      %s184 = smul.addr %s183, 8
      %s185 = scalar_lea.vmem %s3, %s184
      %p186 = scmp.lt.s32.totalorder %s18, 1
      %s187 = scalar_select %p186, %s18, 1
      %p188 = scmp.lt.s32.totalorder %s19, 0
      %s189 = scalar_select %p188, %s19, 0
      %s190 = smul.addr %s187, 4
      %s191 = sadd.s32 %s189, %s190
      %s192 = smul.addr %s191, 8
      %s193 = scalar_lea.vmem %s0, %s192
      %p194 = scmp.lt.s32.totalorder %s18, 1
      %s195 = scalar_select %p194, %s18, 1
      %p196 = scmp.lt.s32.totalorder %s19, 0
      %s197 = scalar_select %p196, %s19, 0
      %s198 = smul.addr %s195, 4
      %s199 = sadd.s32 %s197, %s198
      %s200 = smul.addr %s199, 8
      %s201 = scalar_lea.vmem %s3, %s200
      %v202 = vld [vmem:[%s1] sm:$0xff]
      %v203 = vld [vmem:[%s1 + $0x8] sm:$0xff]
      %v204 = vld [vmem:[%s1 + $0x10] sm:$0xff]
      %v205 = vld [vmem:[%s1 + $0x18] sm:$0xff]
      %v206 = vld [vmem:[%s1 + $0x20] sm:$0xff]
      %v207 = vld [vmem:[%s1 + $0x28] sm:$0xff]
      %v208 = vld [vmem:[%s1 + $0x30] sm:$0xff]
      %v209 = vld [vmem:[%s1 + $0x38] sm:$0xff]
      %v210 = vld [vmem:[%s1 + $0x40] sm:$0xff]
      %v211 = vld [vmem:[%s1 + $0x48] sm:$0xff]
      %v212 = vld [vmem:[%s1 + $0x50] sm:$0xff]
      %v213 = vld [vmem:[%s1 + $0x58] sm:$0xff]
      %v214 = vld [vmem:[%s1 + $0x60] sm:$0xff]
      %v215 = vld [vmem:[%s1 + $0x68] sm:$0xff]
      %v216 = vld [vmem:[%s1 + $0x70] sm:$0xff]
      %v217 = vld [vmem:[%s1 + $0x78] sm:$0xff]
      %v218 = vld [vmem:[%s1 + $0x80] sm:$0xff]
      %v219 = vld [vmem:[%s1 + $0x88] sm:$0xff]
      %v220 = vld [vmem:[%s1 + $0x90] sm:$0xff]
      %v221 = vld [vmem:[%s1 + $0x98] sm:$0xff]
      %v222 = vld [vmem:[%s1 + $0xa0] sm:$0xff]
      %v223 = vld [vmem:[%s1 + $0xa8] sm:$0xff]
      %v224 = vld [vmem:[%s1 + $0xb0] sm:$0xff]
      %v225 = vld [vmem:[%s1 + $0xb8] sm:$0xff]
      %v226 = vld [vmem:[%s1 + $0xc0] sm:$0xff]
      %v227 = vld [vmem:[%s1 + $0xc8] sm:$0xff]
      %v228 = vld [vmem:[%s1 + $0xd0] sm:$0xff]
      %v229 = vld [vmem:[%s1 + $0xd8] sm:$0xff]
      %v230 = vld [vmem:[%s1 + $0xe0] sm:$0xff]
      %v231 = vld [vmem:[%s1 + $0xe8] sm:$0xff]
      %v232 = vld [vmem:[%s1 + $0xf0] sm:$0xff]
      %v233 = vld [vmem:[%s1 + $0xf8] sm:$0xff]
      %v234 = vld [vmem:[%s193] sm:$0xff]
      %v235 = vld [vmem:[%s193 + $0x8] sm:$0xff]
      %v236 = vld [vmem:[%s193 + $0x10] sm:$0xff]
      %v237 = vld [vmem:[%s193 + $0x18] sm:$0xff]
      %vm238 = vcmask 261120
      %v240 = vsel %vm238, %v202, 0
      %v243 = vsel %vm238, %v203, 0
      %v246 = vsel %vm238, %v204, 0
      %v249 = vsel %vm238, %v205, 0
      %v252 = vsel %vm238, %v206, 0
      %v255 = vsel %vm238, %v207, 0
      %v258 = vsel %vm238, %v208, 0
      %v261 = vsel %vm238, %v209, 0
      %v264 = vsel %vm238, %v210, 0
      %v267 = vsel %vm238, %v211, 0
      %v270 = vsel %vm238, %v212, 0
      %v273 = vsel %vm238, %v213, 0
      %v276 = vsel %vm238, %v214, 0
      %v279 = vsel %vm238, %v215, 0
      %v282 = vsel %vm238, %v216, 0
      %v285 = vsel %vm238, %v217, 0
      %v288 = vsel %vm238, %v218, 0
      %v291 = vsel %vm238, %v219, 0
      %v294 = vsel %vm238, %v220, 0
      %v297 = vsel %vm238, %v221, 0
      %v300 = vsel %vm238, %v222, 0
      %v303 = vsel %vm238, %v223, 0
      %v306 = vsel %vm238, %v224, 0
      %v309 = vsel %vm238, %v225, 0
      %v312 = vsel %vm238, %v226, 0
      %v315 = vsel %vm238, %v227, 0
      %v318 = vsel %vm238, %v228, 0
      %v321 = vsel %vm238, %v229, 0
      %v324 = vsel %vm238, %v230, 0
      %v327 = vsel %vm238, %v231, 0
      %v330 = vsel %vm238, %v232, 0
      %v333 = vsel %vm238, %v233, 0
      %335 = vmatprep.subr.mxu0 0.0
      %336 = vmatpush1.msra.mxu0 %v234
      %337 = vmatprep.subr.mxu0 0.0
      %338 = vmatpush1.msra.mxu0 %v235
      %339 = vmatprep.subr.mxu0 0.0
      %340 = vmatpush1.msra.mxu0 %v236
      %341 = vmatprep.subr.mxu0 0.0
      %342 = vmatpush1.msra.mxu0 %v237
      %343 = vmatprep.subr.mxu0 0.0
      %344 = vmatpush1.msra.mxu0 0.0
      %345 = vmatprep.subr.mxu0 0.0
      %346 = vmatpush1.msra.mxu0 0.0
      %347 = vmatprep.subr.mxu0 0.0
      %348 = vmatpush1.msra.mxu0 0.0
      %349 = vmatprep.subr.mxu0 0.0
      %350 = vmatpush1.msra.mxu0 0.0
      %351 = vmatprep.subr.mxu0 0.0
      %352 = vmatpush1.msra.mxu0 0.0
      %353 = vmatprep.subr.mxu0 0.0
      %354 = vmatpush1.msra.mxu0 0.0
      %355 = vmatprep.subr.mxu0 0.0
      %356 = vmatpush1.msra.mxu0 0.0
      %357 = vmatprep.subr.mxu0 0.0
      %358 = vmatpush1.msra.mxu0 0.0
      %359 = vmatprep.subr.mxu0 0.0
      %360 = vmatpush1.msra.mxu0 0.0
      %361 = vmatprep.subr.mxu0 0.0
      %362 = vmatpush1.msra.mxu0 0.0
      %363 = vmatprep.subr.mxu0 0.0
      %364 = vmatpush1.msra.mxu0 0.0
      %365 = vmatprep.subr.mxu0 0.0
      %366 = vmatpush1.msra.mxu0 0.0
      %367 = vmatprep.subr.mxu0 0.0
      %368 = vmatpush1.msra.mxu0 0.0
      %369 = vmatprep.subr.mxu0 0.0
      %370 = vmatpush1.msra.mxu0 0.0
      %371 = vmatprep.subr.mxu0 0.0
      %372 = vmatpush1.msra.mxu0 0.0
      %373 = vmatprep.subr.mxu0 0.0
      %374 = vmatpush1.msra.mxu0 0.0
      %375 = vmatprep.subr.mxu0 0.0
      %376 = vmatpush1.msra.mxu0 0.0
      %377 = vmatprep.subr.mxu0 0.0
      %378 = vmatpush1.msra.mxu0 0.0
      %379 = vmatprep.subr.mxu0 0.0
      %380 = vmatpush1.msra.mxu0 0.0
      %381 = vmatprep.subr.mxu0 0.0
      %382 = vmatpush1.msra.mxu0 0.0
      %383 = vmatprep.subr.mxu0 0.0
      %384 = vmatpush1.msra.mxu0 0.0
      %385 = vmatprep.subr.mxu0 0.0
      %386 = vmatpush1.msra.mxu0 0.0
      %387 = vmatprep.subr.mxu0 0.0
      %388 = vmatpush1.msra.mxu0 0.0
      %389 = vmatprep.subr.mxu0 0.0
      %390 = vmatpush1.msra.mxu0 0.0
      %391 = vmatprep.subr.mxu0 0.0
      %392 = vmatpush1.msra.mxu0 0.0
      %393 = vmatprep.subr.mxu0 0.0
      %394 = vmatpush1.msra.mxu0 0.0
      %395 = vmatprep.subr.mxu0 0.0
      %396 = vmatpush1.msra.mxu0 0.0
      %397 = vmatprep.subr.mxu0 0.0
      %398 = vmatpush1.msra.mxu0 0.0
      %399 = vmatprep.mubr.f32.mxu0 0.0
      %400 = vmatmul.mubr.f32.gmra.mrb[0].mxu0 %v240
      %v401 = vpop.f32.mrb[0].mxu0
      %v402 = vadd.f32 0.0, %v401
      %v403 = vpop.f32.mrb[0].mxu0
      %404 = vmatprep.mubr.f32.mxu0 0.0
      %405 = vmatmul.mubr.f32.gmra.mrb[0].mxu0 %v243
      %v406 = vpop.f32.mrb[0].mxu0
      %v407 = vadd.f32 0.0, %v406
      %v408 = vpop.f32.mrb[0].mxu0
      %409 = vmatprep.mubr.f32.mxu0 0.0
      %410 = vmatmul.mubr.f32.gmra.mrb[0].mxu0 %v246
      %v411 = vpop.f32.mrb[0].mxu0
      %v412 = vadd.f32 0.0, %v411
      %v413 = vpop.f32.mrb[0].mxu0
      %414 = vmatprep.mubr.f32.mxu0 0.0
      %415 = vmatmul.mubr.f32.gmra.mrb[0].mxu0 %v249
      %v416 = vpop.f32.mrb[0].mxu0
      %v417 = vadd.f32 0.0, %v416
      %v418 = vpop.f32.mrb[0].mxu0
      %419 = vmatprep.mubr.f32.mxu0 0.0
      %420 = vmatmul.mubr.f32.gmra.mrb[0].mxu0 %v252
      %v421 = vpop.f32.mrb[0].mxu0
      %v422 = vadd.f32 0.0, %v421
      %v423 = vpop.f32.mrb[0].mxu0
      %424 = vmatprep.mubr.f32.mxu0 0.0
      %425 = vmatmul.mubr.f32.gmra.mrb[0].mxu0 %v255
      %v426 = vpop.f32.mrb[0].mxu0
      %v427 = vadd.f32 0.0, %v426
      %v428 = vpop.f32.mrb[0].mxu0
      %429 = vmatprep.mubr.f32.mxu0 0.0
      %430 = vmatmul.mubr.f32.gmra.mrb[0].mxu0 %v258
      %v431 = vpop.f32.mrb[0].mxu0
      %v432 = vadd.f32 0.0, %v431
      %v433 = vpop.f32.mrb[0].mxu0
      %434 = vmatprep.mubr.f32.mxu0 0.0
      %435 = vmatmul.mubr.f32.gmra.mrb[0].mxu0 %v261
      %v436 = vpop.f32.mrb[0].mxu0
      %v437 = vadd.f32 0.0, %v436
      %v438 = vpop.f32.mrb[0].mxu0
      %439 = vmatprep.mubr.f32.mxu0 0.0
      %440 = vmatmul.mubr.f32.gmra.mrb[0].mxu0 %v264
      %v441 = vpop.f32.mrb[0].mxu0
      %v442 = vadd.f32 0.0, %v441
      %v443 = vpop.f32.mrb[0].mxu0
      %444 = vmatprep.mubr.f32.mxu0 0.0
      %445 = vmatmul.mubr.f32.gmra.mrb[0].mxu0 %v267
      %v446 = vpop.f32.mrb[0].mxu0
      %v447 = vadd.f32 0.0, %v446
      %v448 = vpop.f32.mrb[0].mxu0
      %449 = vmatprep.mubr.f32.mxu0 0.0
      %450 = vmatmul.mubr.f32.gmra.mrb[0].mxu0 %v270
      %v451 = vpop.f32.mrb[0].mxu0
      %v452 = vadd.f32 0.0, %v451
      %v453 = vpop.f32.mrb[0].mxu0
      %454 = vmatprep.mubr.f32.mxu0 0.0
      %455 = vmatmul.mubr.f32.gmra.mrb[0].mxu0 %v273
      %v456 = vpop.f32.mrb[0].mxu0
      %v457 = vadd.f32 0.0, %v456
      %v458 = vpop.f32.mrb[0].mxu0
      %459 = vmatprep.mubr.f32.mxu0 0.0
      %460 = vmatmul.mubr.f32.gmra.mrb[0].mxu0 %v276
      %v461 = vpop.f32.mrb[0].mxu0
      %v462 = vadd.f32 0.0, %v461
      %v463 = vpop.f32.mrb[0].mxu0
      %464 = vmatprep.mubr.f32.mxu0 0.0
      %465 = vmatmul.mubr.f32.gmra.mrb[0].mxu0 %v279
      %v466 = vpop.f32.mrb[0].mxu0
      %v467 = vadd.f32 0.0, %v466
      %v468 = vpop.f32.mrb[0].mxu0
      %469 = vmatprep.mubr.f32.mxu0 0.0
      %470 = vmatmul.mubr.f32.gmra.mrb[0].mxu0 %v282
      %v471 = vpop.f32.mrb[0].mxu0
      %v472 = vadd.f32 0.0, %v471
      %v473 = vpop.f32.mrb[0].mxu0
      %474 = vmatprep.mubr.f32.mxu0 0.0
      %475 = vmatmul.mubr.f32.gmra.mrb[0].mxu0 %v285
      %v476 = vpop.f32.mrb[0].mxu0
      %v477 = vadd.f32 0.0, %v476
      %v478 = vpop.f32.mrb[0].mxu0
      %479 = vmatprep.mubr.f32.mxu0 0.0
      %480 = vmatmul.mubr.f32.gmra.mrb[0].mxu0 %v288
      %v481 = vpop.f32.mrb[0].mxu0
      %v482 = vadd.f32 0.0, %v481
      %v483 = vpop.f32.mrb[0].mxu0
      %484 = vmatprep.mubr.f32.mxu0 0.0
      %485 = vmatmul.mubr.f32.gmra.mrb[0].mxu0 %v291
      %v486 = vpop.f32.mrb[0].mxu0
      %v487 = vadd.f32 0.0, %v486
      %v488 = vpop.f32.mrb[0].mxu0
      %489 = vmatprep.mubr.f32.mxu0 0.0
      %490 = vmatmul.mubr.f32.gmra.mrb[0].mxu0 %v294
      %v491 = vpop.f32.mrb[0].mxu0
      %v492 = vadd.f32 0.0, %v491
      %v493 = vpop.f32.mrb[0].mxu0
      %494 = vmatprep.mubr.f32.mxu0 0.0
      %495 = vmatmul.mubr.f32.gmra.mrb[0].mxu0 %v297
      %v496 = vpop.f32.mrb[0].mxu0
      %v497 = vadd.f32 0.0, %v496
      %v498 = vpop.f32.mrb[0].mxu0
      %499 = vmatprep.mubr.f32.mxu0 0.0
      %500 = vmatmul.mubr.f32.gmra.mrb[0].mxu0 %v300
      %v501 = vpop.f32.mrb[0].mxu0
      %v502 = vadd.f32 0.0, %v501
      %v503 = vpop.f32.mrb[0].mxu0
      %504 = vmatprep.mubr.f32.mxu0 0.0
      %505 = vmatmul.mubr.f32.gmra.mrb[0].mxu0 %v303
      %v506 = vpop.f32.mrb[0].mxu0
      %v507 = vadd.f32 0.0, %v506
      %v508 = vpop.f32.mrb[0].mxu0
      %509 = vmatprep.mubr.f32.mxu0 0.0
      %510 = vmatmul.mubr.f32.gmra.mrb[0].mxu0 %v306
      %v511 = vpop.f32.mrb[0].mxu0
      %v512 = vadd.f32 0.0, %v511
      %v513 = vpop.f32.mrb[0].mxu0
      %514 = vmatprep.mubr.f32.mxu0 0.0
      %515 = vmatmul.mubr.f32.gmra.mrb[0].mxu0 %v309
      %v516 = vpop.f32.mrb[0].mxu0
      %v517 = vadd.f32 0.0, %v516
      %v518 = vpop.f32.mrb[0].mxu0
      %519 = vmatprep.mubr.f32.mxu0 0.0
      %520 = vmatmul.mubr.f32.gmra.mrb[0].mxu0 %v312
      %v521 = vpop.f32.mrb[0].mxu0
      %v522 = vadd.f32 0.0, %v521
      %v523 = vpop.f32.mrb[0].mxu0
      %524 = vmatprep.mubr.f32.mxu0 0.0
      %525 = vmatmul.mubr.f32.gmra.mrb[0].mxu0 %v315
      %v526 = vpop.f32.mrb[0].mxu0
      %v527 = vadd.f32 0.0, %v526
      %v528 = vpop.f32.mrb[0].mxu0
      %529 = vmatprep.mubr.f32.mxu0 0.0
      %530 = vmatmul.mubr.f32.gmra.mrb[0].mxu0 %v318
      %v531 = vpop.f32.mrb[0].mxu0
      %v532 = vadd.f32 0.0, %v531
      %v533 = vpop.f32.mrb[0].mxu0
      %534 = vmatprep.mubr.f32.mxu0 0.0
      %535 = vmatmul.mubr.f32.gmra.mrb[0].mxu0 %v321
      %v536 = vpop.f32.mrb[0].mxu0
      %v537 = vadd.f32 0.0, %v536
      %v538 = vpop.f32.mrb[0].mxu0
      %539 = vmatprep.mubr.f32.mxu0 0.0
      %540 = vmatmul.mubr.f32.gmra.mrb[0].mxu0 %v324
      %v541 = vpop.f32.mrb[0].mxu0
      %v542 = vadd.f32 0.0, %v541
      %v543 = vpop.f32.mrb[0].mxu0
      %544 = vmatprep.mubr.f32.mxu0 0.0
      %545 = vmatmul.mubr.f32.gmra.mrb[0].mxu0 %v327
      %v546 = vpop.f32.mrb[0].mxu0
      %v547 = vadd.f32 0.0, %v546
      %v548 = vpop.f32.mrb[0].mxu0
      %549 = vmatprep.mubr.f32.mxu0 0.0
      %550 = vmatmul.mubr.f32.gmra.mrb[0].mxu0 %v330
      %v551 = vpop.f32.mrb[0].mxu0
      %v552 = vadd.f32 0.0, %v551
      %v553 = vpop.f32.mrb[0].mxu0
      %554 = vmatprep.mubr.f32.mxu0 0.0
      %555 = vmatmul.mubr.f32.gmra.mrb[0].mxu0 %v333
      %v556 = vpop.f32.mrb[0].mxu0
      %v557 = vadd.f32 0.0, %v556
      %v558 = vpop.f32.mrb[0].mxu0
      %559 = vdwg.mxu0
      %v560 = vmax.f32 %v402, %v422
      %v561 = vmax.f32 %v407, %v427
      %v562 = vmax.f32 %v412, %v432
      %v563 = vmax.f32 %v417, %v437
      %v564 = vmax.f32 %v560, %v442
      %v565 = vmax.f32 %v561, %v447
      %v566 = vmax.f32 %v562, %v452
      %v567 = vmax.f32 %v563, %v457
      %v568 = vmax.f32 %v564, %v462
      %v569 = vmax.f32 %v565, %v467
      %v570 = vmax.f32 %v566, %v472
      %v571 = vmax.f32 %v567, %v477
      %v572 = vmax.f32 %v568, %v482
      %v573 = vmax.f32 %v569, %v487
      %v574 = vmax.f32 %v570, %v492
      %v575 = vmax.f32 %v571, %v497
      %v576 = vmax.f32 %v572, %v502
      %v577 = vmax.f32 %v573, %v507
      %v578 = vmax.f32 %v574, %v512
      %v579 = vmax.f32 %v575, %v517
      %v580 = vmax.f32 %v576, %v522
      %v581 = vmax.f32 %v577, %v527
      %v582 = vmax.f32 %v578, %v532
      %v583 = vmax.f32 %v579, %v537
      %v584 = vmax.f32 %v580, %v542
      %v585 = vmax.f32 %v581, %v547
      %v586 = vmax.f32 %v582, %v552
      %v587 = vmax.f32 %v583, %v557
      %v588 = vld [vmem:[%s2] sm:$0xff]
      %v589 = vld [vmem:[%s2 + $0x8] sm:$0xff]
      %v590 = vld [vmem:[%s2 + $0x10] sm:$0xff]
      %v591 = vld [vmem:[%s2 + $0x18] sm:$0xff]
      %593 = vset.pattern.permute.xlu0 0
      %594 = vperm.xlu0 %593, %v588
      %v595 = vpop.permute.xlu0 %594
      %598 = vset.pattern.permute.xlu0 0
      %599 = vperm.xlu0 %598, %v589
      %v600 = vpop.permute.xlu0 %599
      %603 = vset.pattern.permute.xlu0 0
      %604 = vperm.xlu0 %603, %v590
      %v605 = vpop.permute.xlu0 %604
      %608 = vset.pattern.permute.xlu0 0
      %609 = vperm.xlu0 %608, %v591
      %v610 = vpop.permute.xlu0 %609
      %v612 = vadd.f32 %v584, %v595
      %v613 = vadd.f32 %v585, %v600
      %v614 = vadd.f32 %v586, %v605
      %v615 = vadd.f32 %v587, %v610
      %v616 = vmax.f32 %v612, 0.0
      %v617 = vmax.f32 %v613, 0.0
      %v618 = vmax.f32 %v614, 0.0
      %v619 = vmax.f32 %v615, 0.0
      %620 = vst [vmem:[%s201] sm:$0xff] %v616
      %621 = vst [vmem:[%s201 + $0x8] sm:$0xff] %v617
      %622 = vst [vmem:[%s201 + $0x10] sm:$0xff] %v618
      %623 = vst [vmem:[%s201 + $0x18] sm:$0xff] %v619
      %p624 = scmp.lt.s32.totalorder %s18, 1
      %s625 = scalar_select %p624, %s18, 1
      %p626 = scmp.lt.s32.totalorder %s19, 0
      %s627 = scalar_select %p626, %s19, 0
      %s628 = smul.addr %s625, 4
      %s629 = sadd.s32 %s627, %s628
      %s630 = smul.addr %s629, 8
      %s631 = scalar_lea.vmem %s3, %s630
      // Predicated region
      $region33: #{_lambda_.2} parent=31 // pred_check
        %p632 = pneg %p116
      $region34: #{_lambda_.2} parent=31 // pred_check_branch
        %634 = sbr.rel (%p632) target = $region36
      $region35: #{_lambda_.2} parent=31 // pred_region
        _
      $region36: #{_lambda_.2} parent=31 // pred_fallthru
        _
    $region32: #{_lambda_.2} parent=5 // pred_fallthru
      _
    %p635 = scmp.le.s32.totalorder 2, %s9
    // Predicated region
    $region37: #{_lambda_.2} parent=5 // pred_check
      %p636 = pneg %p635
    $region38: #{_lambda_.2} parent=5 // pred_check_branch
      %638 = sbr.rel (%p636) target = $region40
    $region39: #{_lambda_.2} parent=5 // pred_region
      %s639 = ssub.s32 %s9, 2
      // Predicated region
      $region41: #{_lambda_.2} parent=39 // pred_check
        %p640 = pneg %p122
      $region42: #{_lambda_.2} parent=39 // pred_check_branch
        %642 = sbr.rel (%p640) target = $region44
      $region43: #{_lambda_.2} parent=39 // pred_region
        %p643 = scmp.lt.s32.totalorder %s20, 1
        %s644 = scalar_select %p643, %s20, 1
        %p645 = scmp.lt.s32.totalorder %s21, 0
        %s646 = scalar_select %p645, %s21, 0
        %s647 = smul.addr %s644, 4
        %s648 = sadd.s32 %s646, %s647
        %s649 = smul.addr %s648, 8
        %s650 = scalar_lea.vmem %s3, %s649
      $region44: #{_lambda_.2} parent=39 // pred_fallthru
        _
    $region40: #{_lambda_.2} parent=5 // pred_fallthru
      _
  $region6: #{_lambda_.2} parent=0 // loop_footer
    %s13 = sadd.s32 1, %s9
  $region7: #{_lambda_.2} parent=0 // loop_footer_branch
    %8 = sbr.rel target = $region3
  $region8: #{_lambda_.2} parent=0 // loop_exit
    _

// kernel: _lambda_.3
$region0: #{_lambda_.3}
  #allocation0 [shape = 'u32[]', space=smem, size = 0x4, offset = 0x4, fixed_abs, tag = 'smem constant byte address 0x4 - core index']
  #allocation1 [shape = 'u32[144,128]{1,0:T(1,128)}', space=vmem, size = 0x12000, scoped, tag = 'internal scratch']
  %s0 = inlined_call_operand.vmem [shape: f32[2,32,128], index: 0, kind: input, shape index: {}]
  %s1 = inlined_call_operand.vmem [shape: f32[512,32], index: 1, kind: input, shape index: {}]
  %s2 = inlined_call_operand.vmem [shape: f32[64,1], index: 2, kind: input, shape index: {}]
  %s3 = inlined_call_operand.vmem [shape: f32[2,64,128], index: 3, kind: output, shape index: {}]
  %s4 = sld [smem:[#allocation0]]
  $region45: #{_lambda_.3} parent=0
    _
  %s6 = ssub.s32 1, %s4
  %s7 = scalar_select 0, %s6, %s4
  loop: start=0, step=1, limit=4
  $region2: #{_lambda_.3} parent=0 // loop_pre_header
    _
  $region3: #{_lambda_.3} parent=0 // loop_header
    %s9 = sphi 0, %s13
    %p10 = scmp.ge.s32.totalorder %s9, 4
    %s16 = sphi 0, %s28
    %s17 = sphi 0, %s24
    %s18 = sphi 0, %s16
    %s19 = sphi 0, %s17
    %s20 = sphi 0, %s18
    %s21 = sphi 0, %s19
    %s33 = sphi 0, %s35
    %s36 = sphi 0, %s33
    %s37 = sphi 0, %s36
    %s53 = sphi 0, %s37
    %s57 = sphi 0, %s57
    %s59 = sphi 0, %s57
    %s60 = sphi 0, %s59
    %s74 = sphi 0, %s60
    %s78 = sphi 0, %s78
    %s80 = sphi 0, %s78
    %s81 = sphi 0, %s80
    %s95 = sphi 0, %s81
    %s103 = sphi 0, %s105
    %s106 = sphi 0, %s103
    %s107 = sphi 0, %s106
    %s123 = sphi 0, %s107
  $region4: #{_lambda_.3} parent=0 // loop_header_branch
    %12 = sbr.rel (%p10) target = $region8
  $region5: #{_lambda_.3} parent=0 // loop_body
    %s14 = ssub.s32 %s9, 1
    %s15 = ssub.s32 %s9, 2
    %s22 = sadd.s32 1, %s17
    %p23 = scmp.ge.s32.totalorder %s22, 1
    %s24 = scalar_select %p23, 0, %s22
    %s25 = sadd.s32 1, %s16
    %s26 = scalar_select %p23, %s25, %s16
    %p27 = scmp.ge.s32.totalorder %s26, 2
    %s28 = scalar_select %p27, 0, %s26
    %s29 = ssub.s32 %s16, %s28
    %s30 = ssub.s32 %s17, %s24
    %s31 = sor.u32 %s29, %s30
    %p32 = scmp.eq.s32.totalorder %s31, 0
    %s34 = sadd.s32 %s33, 1
    %s35 = scalar_select %p32, %s33, %s34
    %p38 = pneg %p32
    %p39 = scmp.eq.s32.totalorder %s9, 1
    %p40 = por %p38, %p39
    %p41 = scmp.ne.s32.totalorder %s33, %s36
    %p42 = scmp.eq.s32.totalorder %s9, 0
    %p43 = por %p41, %p42
    %p44 = scmp.ne.s32.totalorder %s33, %s36
    %p45 = scmp.eq.s32.totalorder %s14, 1
    %p46 = por %p44, %p45
    %p47 = scmp.ne.s32.totalorder %s36, %s37
    %p48 = scmp.eq.s32.totalorder %s14, 0
    %p49 = por %p47, %p48
    %p50 = scmp.ne.s32.totalorder %s36, %s37
    %p51 = scmp.eq.s32.totalorder %s15, 1
    %p52 = por %p50, %p51
    %p54 = scmp.ne.s32.totalorder %s37, %s53
    %p55 = scmp.eq.s32.totalorder %s15, 0
    %p56 = por %p54, %p55
    %s58 = sadd.s32 %s57, 1
    %p61 = scmp.eq.s32.totalorder %s9, 1
    %p62 = scmp.ne.s32.totalorder %s57, %s59
    %p63 = scmp.eq.s32.totalorder %s9, 0
    %p64 = por %p62, %p63
    %p65 = scmp.ne.s32.totalorder %s57, %s59
    %p66 = scmp.eq.s32.totalorder %s14, 1
    %p67 = por %p65, %p66
    %p68 = scmp.ne.s32.totalorder %s59, %s60
    %p69 = scmp.eq.s32.totalorder %s14, 0
    %p70 = por %p68, %p69
    %p71 = scmp.ne.s32.totalorder %s59, %s60
    %p72 = scmp.eq.s32.totalorder %s15, 1
    %p73 = por %p71, %p72
    %p75 = scmp.ne.s32.totalorder %s60, %s74
    %p76 = scmp.eq.s32.totalorder %s15, 0
    %p77 = por %p75, %p76
    %s79 = sadd.s32 %s78, 1
    %p82 = scmp.eq.s32.totalorder %s9, 1
    %p83 = scmp.ne.s32.totalorder %s78, %s80
    %p84 = scmp.eq.s32.totalorder %s9, 0
    %p85 = por %p83, %p84
    %p86 = scmp.ne.s32.totalorder %s78, %s80
    %p87 = scmp.eq.s32.totalorder %s14, 1
    %p88 = por %p86, %p87
    %p89 = scmp.ne.s32.totalorder %s80, %s81
    %p90 = scmp.eq.s32.totalorder %s14, 0
    %p91 = por %p89, %p90
    %p92 = scmp.ne.s32.totalorder %s80, %s81
    %p93 = scmp.eq.s32.totalorder %s15, 1
    %p94 = por %p92, %p93
    %p96 = scmp.ne.s32.totalorder %s81, %s95
    %p97 = scmp.eq.s32.totalorder %s15, 0
    %p98 = por %p96, %p97
    %s99 = ssub.s32 %s16, %s28
    %s100 = ssub.s32 %s17, %s24
    %s101 = sor.u32 %s99, %s100
    %p102 = scmp.eq.s32.totalorder %s101, 0
    %s104 = sadd.s32 %s103, 1
    %s105 = scalar_select %p102, %s103, %s104
    %p108 = pneg %p102
    %p109 = scmp.eq.s32.totalorder %s9, 1
    %p110 = por %p108, %p109
    %p111 = scmp.ne.s32.totalorder %s103, %s106
    %p112 = scmp.eq.s32.totalorder %s9, 0
    %p113 = por %p111, %p112
    %p114 = scmp.ne.s32.totalorder %s103, %s106
    %p115 = scmp.eq.s32.totalorder %s14, 1
    %p116 = por %p114, %p115
    %p117 = scmp.ne.s32.totalorder %s106, %s107
    %p118 = scmp.eq.s32.totalorder %s14, 0
    %p119 = por %p117, %p118
    %p120 = scmp.ne.s32.totalorder %s106, %s107
    %p121 = scmp.eq.s32.totalorder %s15, 1
    %p122 = por %p120, %p121
    %p124 = scmp.ne.s32.totalorder %s107, %s123
    %p125 = scmp.eq.s32.totalorder %s15, 0
    %p126 = por %p124, %p125
    %p127 = scmp.le.s32.totalorder 1, %s9
    %p128 = scmp.lt.s32.totalorder %s9, 3
    %p129 = pnand %p127, %p128
    %p130 = pneg %p129
    // Predicated region
    $region9: #{_lambda_.3} parent=5 // pred_check
      _
    $region10: #{_lambda_.3} parent=5 // pred_check_branch
      %132 = sbr.rel (%p129) target = $region12
    $region11: #{_lambda_.3} parent=5 // pred_region
      %s133 = ssub.s32 %s9, 1
      // Predicated region
      $region13: #{_lambda_.3} parent=11 // pred_check
        %p134 = pneg %p70
      $region14: #{_lambda_.3} parent=11 // pred_check_branch
        %136 = sbr.rel (%p134) target = $region16
      $region15: #{_lambda_.3} parent=11 // pred_region
        _
      $region16: #{_lambda_.3} parent=11 // pred_fallthru
        _
      // Predicated region
      $region17: #{_lambda_.3} parent=11 // pred_check
        %p137 = pneg %p91
      $region18: #{_lambda_.3} parent=11 // pred_check_branch
        %139 = sbr.rel (%p137) target = $region20
      $region19: #{_lambda_.3} parent=11 // pred_region
        _
      $region20: #{_lambda_.3} parent=11 // pred_fallthru
        _
    $region12: #{_lambda_.3} parent=5 // pred_fallthru
      _
    %p140 = scmp.lt.s32.totalorder %s9, 2
    // Predicated region
    $region21: #{_lambda_.3} parent=5 // pred_check
      %p141 = pneg %p140
    $region22: #{_lambda_.3} parent=5 // pred_check_branch
      %143 = sbr.rel (%p141) target = $region24
    $region23: #{_lambda_.3} parent=5 // pred_region
      // Predicated region
      $region25: #{_lambda_.3} parent=23 // pred_check
        %p144 = pneg %p43
      $region26: #{_lambda_.3} parent=23 // pred_check_branch
        %146 = sbr.rel (%p144) target = $region28
      $region27: #{_lambda_.3} parent=23 // pred_region
        %p147 = scmp.lt.s32.totalorder %s16, 1
        %s148 = scalar_select %p147, %s16, 1
        %p149 = scmp.lt.s32.totalorder %s17, 0
        %s150 = scalar_select %p149, %s17, 0
        %s151 = smul.addr %s148, 4
        %s152 = sadd.s32 %s150, %s151
        %s153 = smul.addr %s152, 8
        %s154 = scalar_lea.vmem %s0, %s153
      $region28: #{_lambda_.3} parent=23 // pred_fallthru
        _
    $region24: #{_lambda_.3} parent=5 // pred_fallthru
      _
    %p155 = scmp.le.s32.totalorder 1, %s9
    %p156 = scmp.lt.s32.totalorder %s9, 3
    %p157 = pnand %p155, %p156
    %p158 = pneg %p157
    // Predicated region
    $region29: #{_lambda_.3} parent=5 // pred_check
      _
    $region30: #{_lambda_.3} parent=5 // pred_check_branch
      %160 = sbr.rel (%p157) target = $region32
    $region31: #{_lambda_.3} parent=5 // pred_region
      %s161 = ssub.s32 %s9, 1
      %p162 = scmp.lt.s32.totalorder %s18, 1
      %s163 = scalar_select %p162, %s18, 1
      %p164 = scmp.lt.s32.totalorder %s19, 0
      %s165 = scalar_select %p164, %s19, 0
      %s166 = smul.addr %s163, 4
      %s167 = sadd.s32 %s165, %s166
      %s168 = smul.addr %s167, 8
      %s169 = scalar_lea.vmem %s0, %s168
      %p170 = pneg %p49
      %p171 = pneg %p46
      %p172 = pneg %p70
      %p173 = pneg %p67
      %p174 = pneg %p91
      %p175 = pneg %p88
      %p176 = pneg %p119
      %p177 = pneg %p116
      %p178 = scmp.lt.s32.totalorder %s18, 1
      %s179 = scalar_select %p178, %s18, 1
      %p180 = scmp.lt.s32.totalorder %s19, 0
      %s181 = scalar_select %p180, %s19, 0
      %s182 = smul.addr %s179, 8
      %s183 = sadd.s32 %s181, %s182
      %s184 = smul.addr %s183, 8
      %s185 = scalar_lea.vmem %s3, %s184
      %p186 = scmp.lt.s32.totalorder %s18, 1
      %s187 = scalar_select %p186, %s18, 1
      %p188 = scmp.lt.s32.totalorder %s19, 0
      %s189 = scalar_select %p188, %s19, 0
      %s190 = smul.addr %s187, 4
      %s191 = sadd.s32 %s189, %s190
      %s192 = smul.addr %s191, 8
      %s193 = scalar_lea.vmem %s0, %s192
      %p194 = scmp.lt.s32.totalorder %s18, 1
      %s195 = scalar_select %p194, %s18, 1
      %p196 = scmp.lt.s32.totalorder %s19, 0
      %s197 = scalar_select %p196, %s19, 0
      %s198 = smul.addr %s195, 8
      %s199 = sadd.s32 %s197, %s198
      %s200 = smul.addr %s199, 8
      %s201 = scalar_lea.vmem %s3, %s200
      %v202 = vld [vmem:[%s1] sm:$0xff]
      %v203 = vld [vmem:[%s1 + $0x8] sm:$0xff]
      %v204 = vld [vmem:[%s1 + $0x10] sm:$0xff]
      %v205 = vld [vmem:[%s1 + $0x18] sm:$0xff]
      %v206 = vld [vmem:[%s1 + $0x20] sm:$0xff]
      %v207 = vld [vmem:[%s1 + $0x28] sm:$0xff]
      %v208 = vld [vmem:[%s1 + $0x30] sm:$0xff]
      %v209 = vld [vmem:[%s1 + $0x38] sm:$0xff]
      %v210 = vld [vmem:[%s1 + $0x40] sm:$0xff]
      %v211 = vld [vmem:[%s1 + $0x48] sm:$0xff]
      %v212 = vld [vmem:[%s1 + $0x50] sm:$0xff]
      %v213 = vld [vmem:[%s1 + $0x58] sm:$0xff]
      %v214 = vld [vmem:[%s1 + $0x60] sm:$0xff]
      %v215 = vld [vmem:[%s1 + $0x68] sm:$0xff]
      %v216 = vld [vmem:[%s1 + $0x70] sm:$0xff]
      %v217 = vld [vmem:[%s1 + $0x78] sm:$0xff]
      %v218 = vld [vmem:[%s1 + $0x80] sm:$0xff]
      %v219 = vld [vmem:[%s1 + $0x88] sm:$0xff]
      %v220 = vld [vmem:[%s1 + $0x90] sm:$0xff]
      %v221 = vld [vmem:[%s1 + $0x98] sm:$0xff]
      %v222 = vld [vmem:[%s1 + $0xa0] sm:$0xff]
      %v223 = vld [vmem:[%s1 + $0xa8] sm:$0xff]
      %v224 = vld [vmem:[%s1 + $0xb0] sm:$0xff]
      %v225 = vld [vmem:[%s1 + $0xb8] sm:$0xff]
      %v226 = vld [vmem:[%s1 + $0xc0] sm:$0xff]
      %v227 = vld [vmem:[%s1 + $0xc8] sm:$0xff]
      %v228 = vld [vmem:[%s1 + $0xd0] sm:$0xff]
      %v229 = vld [vmem:[%s1 + $0xd8] sm:$0xff]
      %v230 = vld [vmem:[%s1 + $0xe0] sm:$0xff]
      %v231 = vld [vmem:[%s1 + $0xe8] sm:$0xff]
      %v232 = vld [vmem:[%s1 + $0xf0] sm:$0xff]
      %v233 = vld [vmem:[%s1 + $0xf8] sm:$0xff]
      %v234 = vld [vmem:[%s1 + $0x100] sm:$0xff]
      %v235 = vld [vmem:[%s1 + $0x108] sm:$0xff]
      %v236 = vld [vmem:[%s1 + $0x110] sm:$0xff]
      %v237 = vld [vmem:[%s1 + $0x118] sm:$0xff]
      %v238 = vld [vmem:[%s1 + $0x120] sm:$0xff]
      %v239 = vld [vmem:[%s1 + $0x128] sm:$0xff]
      %v240 = vld [vmem:[%s1 + $0x130] sm:$0xff]
      %v241 = vld [vmem:[%s1 + $0x138] sm:$0xff]
      %v242 = vld [vmem:[%s1 + $0x140] sm:$0xff]
      %v243 = vld [vmem:[%s1 + $0x148] sm:$0xff]
      %v244 = vld [vmem:[%s1 + $0x150] sm:$0xff]
      %v245 = vld [vmem:[%s1 + $0x158] sm:$0xff]
      %v246 = vld [vmem:[%s1 + $0x160] sm:$0xff]
      %v247 = vld [vmem:[%s1 + $0x168] sm:$0xff]
      %v248 = vld [vmem:[%s1 + $0x170] sm:$0xff]
      %v249 = vld [vmem:[%s1 + $0x178] sm:$0xff]
      %v250 = vld [vmem:[%s1 + $0x180] sm:$0xff]
      %v251 = vld [vmem:[%s1 + $0x188] sm:$0xff]
      %v252 = vld [vmem:[%s1 + $0x190] sm:$0xff]
      %v253 = vld [vmem:[%s1 + $0x198] sm:$0xff]
      %v254 = vld [vmem:[%s1 + $0x1a0] sm:$0xff]
      %v255 = vld [vmem:[%s1 + $0x1a8] sm:$0xff]
      %v256 = vld [vmem:[%s1 + $0x1b0] sm:$0xff]
      %v257 = vld [vmem:[%s1 + $0x1b8] sm:$0xff]
      %v258 = vld [vmem:[%s1 + $0x1c0] sm:$0xff]
      %v259 = vld [vmem:[%s1 + $0x1c8] sm:$0xff]
      %v260 = vld [vmem:[%s1 + $0x1d0] sm:$0xff]
      %v261 = vld [vmem:[%s1 + $0x1d8] sm:$0xff]
      %v262 = vld [vmem:[%s1 + $0x1e0] sm:$0xff]
      %v263 = vld [vmem:[%s1 + $0x1e8] sm:$0xff]
      %v264 = vld [vmem:[%s1 + $0x1f0] sm:$0xff]
      %v265 = vld [vmem:[%s1 + $0x1f8] sm:$0xff]
      %v266 = vld [vmem:[%s193] sm:$0xff]
      %v267 = vld [vmem:[%s193 + $0x8] sm:$0xff]
      %v268 = vld [vmem:[%s193 + $0x10] sm:$0xff]
      %v269 = vld [vmem:[%s193 + $0x18] sm:$0xff]
      %vm270 = vcmask 261120
      %v272 = vsel %vm270, %v202, 0
      %v275 = vsel %vm270, %v203, 0
      %v278 = vsel %vm270, %v204, 0
      %v281 = vsel %vm270, %v205, 0
      %v284 = vsel %vm270, %v206, 0
      %v287 = vsel %vm270, %v207, 0
      %v290 = vsel %vm270, %v208, 0
      %v293 = vsel %vm270, %v209, 0
      %v296 = vsel %vm270, %v210, 0
      %v299 = vsel %vm270, %v211, 0
      %v302 = vsel %vm270, %v212, 0
      %v305 = vsel %vm270, %v213, 0
      %v308 = vsel %vm270, %v214, 0
      %v311 = vsel %vm270, %v215, 0
      %v314 = vsel %vm270, %v216, 0
      %v317 = vsel %vm270, %v217, 0
      %v320 = vsel %vm270, %v218, 0
      %v323 = vsel %vm270, %v219, 0
      %v326 = vsel %vm270, %v220, 0
      %v329 = vsel %vm270, %v221, 0
      %v332 = vsel %vm270, %v222, 0
      %v335 = vsel %vm270, %v223, 0
      %v338 = vsel %vm270, %v224, 0
      %v341 = vsel %vm270, %v225, 0
      %v344 = vsel %vm270, %v226, 0
      %v347 = vsel %vm270, %v227, 0
      %v350 = vsel %vm270, %v228, 0
      %v353 = vsel %vm270, %v229, 0
      %v356 = vsel %vm270, %v230, 0
      %v359 = vsel %vm270, %v231, 0
      %v362 = vsel %vm270, %v232, 0
      %v365 = vsel %vm270, %v233, 0
      %v368 = vsel %vm270, %v234, 0
      %v371 = vsel %vm270, %v235, 0
      %v374 = vsel %vm270, %v236, 0
      %v377 = vsel %vm270, %v237, 0
      %v380 = vsel %vm270, %v238, 0
      %v383 = vsel %vm270, %v239, 0
      %v386 = vsel %vm270, %v240, 0
      %v389 = vsel %vm270, %v241, 0
      %v392 = vsel %vm270, %v242, 0
      %v395 = vsel %vm270, %v243, 0
      %v398 = vsel %vm270, %v244, 0
      %v401 = vsel %vm270, %v245, 0
      %v404 = vsel %vm270, %v246, 0
      %v407 = vsel %vm270, %v247, 0
      %v410 = vsel %vm270, %v248, 0
      %v413 = vsel %vm270, %v249, 0
      %v416 = vsel %vm270, %v250, 0
      %v419 = vsel %vm270, %v251, 0
      %v422 = vsel %vm270, %v252, 0
      %v425 = vsel %vm270, %v253, 0
      %v428 = vsel %vm270, %v254, 0
      %v431 = vsel %vm270, %v255, 0
      %v434 = vsel %vm270, %v256, 0
      %v437 = vsel %vm270, %v257, 0
      %v440 = vsel %vm270, %v258, 0
      %v443 = vsel %vm270, %v259, 0
      %v446 = vsel %vm270, %v260, 0
      %v449 = vsel %vm270, %v261, 0
      %v452 = vsel %vm270, %v262, 0
      %v455 = vsel %vm270, %v263, 0
      %v458 = vsel %vm270, %v264, 0
      %v461 = vsel %vm270, %v265, 0
      %463 = vmatprep.subr.mxu0 0.0
      %464 = vmatpush1.msra.mxu0 %v266
      %465 = vmatprep.subr.mxu0 0.0
      %466 = vmatpush1.msra.mxu0 %v267
      %467 = vmatprep.subr.mxu0 0.0
      %468 = vmatpush1.msra.mxu0 %v268
      %469 = vmatprep.subr.mxu0 0.0
      %470 = vmatpush1.msra.mxu0 %v269
      %471 = vmatprep.subr.mxu0 0.0
      %472 = vmatpush1.msra.mxu0 0.0
      %473 = vmatprep.subr.mxu0 0.0
      %474 = vmatpush1.msra.mxu0 0.0
      %475 = vmatprep.subr.mxu0 0.0
      %476 = vmatpush1.msra.mxu0 0.0
      %477 = vmatprep.subr.mxu0 0.0
      %478 = vmatpush1.msra.mxu0 0.0
      %479 = vmatprep.subr.mxu0 0.0
      %480 = vmatpush1.msra.mxu0 0.0
      %481 = vmatprep.subr.mxu0 0.0
      %482 = vmatpush1.msra.mxu0 0.0
      %483 = vmatprep.subr.mxu0 0.0
      %484 = vmatpush1.msra.mxu0 0.0
      %485 = vmatprep.subr.mxu0 0.0
      %486 = vmatpush1.msra.mxu0 0.0
      %487 = vmatprep.subr.mxu0 0.0
      %488 = vmatpush1.msra.mxu0 0.0
      %489 = vmatprep.subr.mxu0 0.0
      %490 = vmatpush1.msra.mxu0 0.0
      %491 = vmatprep.subr.mxu0 0.0
      %492 = vmatpush1.msra.mxu0 0.0
      %493 = vmatprep.subr.mxu0 0.0
      %494 = vmatpush1.msra.mxu0 0.0
      %495 = vmatprep.subr.mxu0 0.0
      %496 = vmatpush1.msra.mxu0 0.0
      %497 = vmatprep.subr.mxu0 0.0
      %498 = vmatpush1.msra.mxu0 0.0
      %499 = vmatprep.subr.mxu0 0.0
      %500 = vmatpush1.msra.mxu0 0.0
      %501 = vmatprep.subr.mxu0 0.0
      %502 = vmatpush1.msra.mxu0 0.0
      %503 = vmatprep.subr.mxu0 0.0
      %504 = vmatpush1.msra.mxu0 0.0
      %505 = vmatprep.subr.mxu0 0.0
      %506 = vmatpush1.msra.mxu0 0.0
      %507 = vmatprep.subr.mxu0 0.0
      %508 = vmatpush1.msra.mxu0 0.0
      %509 = vmatprep.subr.mxu0 0.0
      %510 = vmatpush1.msra.mxu0 0.0
      %511 = vmatprep.subr.mxu0 0.0
      %512 = vmatpush1.msra.mxu0 0.0
      %513 = vmatprep.subr.mxu0 0.0
      %514 = vmatpush1.msra.mxu0 0.0
      %515 = vmatprep.subr.mxu0 0.0
      %516 = vmatpush1.msra.mxu0 0.0
      %517 = vmatprep.subr.mxu0 0.0
      %518 = vmatpush1.msra.mxu0 0.0
      %519 = vmatprep.subr.mxu0 0.0
      %520 = vmatpush1.msra.mxu0 0.0
      %521 = vmatprep.subr.mxu0 0.0
      %522 = vmatpush1.msra.mxu0 0.0
      %523 = vmatprep.subr.mxu0 0.0
      %524 = vmatpush1.msra.mxu0 0.0
      %525 = vmatprep.subr.mxu0 0.0
      %526 = vmatpush1.msra.mxu0 0.0
      %527 = vmatprep.mubr.f32.mxu0 0.0
      %528 = vmatmul.mubr.f32.gmra.mrb[0].mxu0 %v272
      %v529 = vpop.f32.mrb[0].mxu0
      %v530 = vadd.f32 0.0, %v529
      %v531 = vpop.f32.mrb[0].mxu0
      %532 = vmatprep.mubr.f32.mxu0 0.0
      %533 = vmatmul.mubr.f32.gmra.mrb[0].mxu0 %v275
      %v534 = vpop.f32.mrb[0].mxu0
      %v535 = vadd.f32 0.0, %v534
      %v536 = vpop.f32.mrb[0].mxu0
      %537 = vmatprep.mubr.f32.mxu0 0.0
      %538 = vmatmul.mubr.f32.gmra.mrb[0].mxu0 %v278
      %v539 = vpop.f32.mrb[0].mxu0
      %v540 = vadd.f32 0.0, %v539
      %v541 = vpop.f32.mrb[0].mxu0
      %542 = vmatprep.mubr.f32.mxu0 0.0
      %543 = vmatmul.mubr.f32.gmra.mrb[0].mxu0 %v281
      %v544 = vpop.f32.mrb[0].mxu0
      %v545 = vadd.f32 0.0, %v544
      %v546 = vpop.f32.mrb[0].mxu0
      %547 = vmatprep.mubr.f32.mxu0 0.0
      %548 = vmatmul.mubr.f32.gmra.mrb[0].mxu0 %v284
      %v549 = vpop.f32.mrb[0].mxu0
      %v550 = vadd.f32 0.0, %v549
      %v551 = vpop.f32.mrb[0].mxu0
      %552 = vmatprep.mubr.f32.mxu0 0.0
      %553 = vmatmul.mubr.f32.gmra.mrb[0].mxu0 %v287
      %v554 = vpop.f32.mrb[0].mxu0
      %v555 = vadd.f32 0.0, %v554
      %v556 = vpop.f32.mrb[0].mxu0
      %557 = vmatprep.mubr.f32.mxu0 0.0
      %558 = vmatmul.mubr.f32.gmra.mrb[0].mxu0 %v290
      %v559 = vpop.f32.mrb[0].mxu0
      %v560 = vadd.f32 0.0, %v559
      %v561 = vpop.f32.mrb[0].mxu0
      %562 = vmatprep.mubr.f32.mxu0 0.0
      %563 = vmatmul.mubr.f32.gmra.mrb[0].mxu0 %v293
      %v564 = vpop.f32.mrb[0].mxu0
      %v565 = vadd.f32 0.0, %v564
      %v566 = vpop.f32.mrb[0].mxu0
      %567 = vmatprep.mubr.f32.mxu0 0.0
      %568 = vmatmul.mubr.f32.gmra.mrb[0].mxu0 %v296
      %v569 = vpop.f32.mrb[0].mxu0
      %v570 = vadd.f32 0.0, %v569
      %v571 = vpop.f32.mrb[0].mxu0
      %572 = vmatprep.mubr.f32.mxu0 0.0
      %573 = vmatmul.mubr.f32.gmra.mrb[0].mxu0 %v299
      %v574 = vpop.f32.mrb[0].mxu0
      %v575 = vadd.f32 0.0, %v574
      %v576 = vpop.f32.mrb[0].mxu0
      %577 = vmatprep.mubr.f32.mxu0 0.0
      %578 = vmatmul.mubr.f32.gmra.mrb[0].mxu0 %v302
      %v579 = vpop.f32.mrb[0].mxu0
      %v580 = vadd.f32 0.0, %v579
      %v581 = vpop.f32.mrb[0].mxu0
      %582 = vmatprep.mubr.f32.mxu0 0.0
      %583 = vmatmul.mubr.f32.gmra.mrb[0].mxu0 %v305
      %v584 = vpop.f32.mrb[0].mxu0
      %v585 = vadd.f32 0.0, %v584
      %v586 = vpop.f32.mrb[0].mxu0
      %587 = vmatprep.mubr.f32.mxu0 0.0
      %588 = vmatmul.mubr.f32.gmra.mrb[0].mxu0 %v308
      %v589 = vpop.f32.mrb[0].mxu0
      %v590 = vadd.f32 0.0, %v589
      %v591 = vpop.f32.mrb[0].mxu0
      %592 = vmatprep.mubr.f32.mxu0 0.0
      %593 = vmatmul.mubr.f32.gmra.mrb[0].mxu0 %v311
      %v594 = vpop.f32.mrb[0].mxu0
      %v595 = vadd.f32 0.0, %v594
      %v596 = vpop.f32.mrb[0].mxu0
      %597 = vmatprep.mubr.f32.mxu0 0.0
      %598 = vmatmul.mubr.f32.gmra.mrb[0].mxu0 %v314
      %v599 = vpop.f32.mrb[0].mxu0
      %v600 = vadd.f32 0.0, %v599
      %v601 = vpop.f32.mrb[0].mxu0
      %602 = vmatprep.mubr.f32.mxu0 0.0
      %603 = vmatmul.mubr.f32.gmra.mrb[0].mxu0 %v317
      %v604 = vpop.f32.mrb[0].mxu0
      %v605 = vadd.f32 0.0, %v604
      %v606 = vpop.f32.mrb[0].mxu0
      %607 = vmatprep.mubr.f32.mxu0 0.0
      %608 = vmatmul.mubr.f32.gmra.mrb[0].mxu0 %v320
      %v609 = vpop.f32.mrb[0].mxu0
      %v610 = vadd.f32 0.0, %v609
      %v611 = vpop.f32.mrb[0].mxu0
      %612 = vmatprep.mubr.f32.mxu0 0.0
      %613 = vmatmul.mubr.f32.gmra.mrb[0].mxu0 %v323
      %v614 = vpop.f32.mrb[0].mxu0
      %v615 = vadd.f32 0.0, %v614
      %v616 = vpop.f32.mrb[0].mxu0
      %617 = vmatprep.mubr.f32.mxu0 0.0
      %618 = vmatmul.mubr.f32.gmra.mrb[0].mxu0 %v326
      %v619 = vpop.f32.mrb[0].mxu0
      %v620 = vadd.f32 0.0, %v619
      %v621 = vpop.f32.mrb[0].mxu0
      %622 = vmatprep.mubr.f32.mxu0 0.0
      %623 = vmatmul.mubr.f32.gmra.mrb[0].mxu0 %v329
      %v624 = vpop.f32.mrb[0].mxu0
      %v625 = vadd.f32 0.0, %v624
      %v626 = vpop.f32.mrb[0].mxu0
      %627 = vmatprep.mubr.f32.mxu0 0.0
      %628 = vmatmul.mubr.f32.gmra.mrb[0].mxu0 %v332
      %v629 = vpop.f32.mrb[0].mxu0
      %v630 = vadd.f32 0.0, %v629
      %v631 = vpop.f32.mrb[0].mxu0
      %632 = vmatprep.mubr.f32.mxu0 0.0
      %633 = vmatmul.mubr.f32.gmra.mrb[0].mxu0 %v335
      %v634 = vpop.f32.mrb[0].mxu0
      %v635 = vadd.f32 0.0, %v634
      %v636 = vpop.f32.mrb[0].mxu0
      %637 = vmatprep.mubr.f32.mxu0 0.0
      %638 = vmatmul.mubr.f32.gmra.mrb[0].mxu0 %v338
      %v639 = vpop.f32.mrb[0].mxu0
      %v640 = vadd.f32 0.0, %v639
      %v641 = vpop.f32.mrb[0].mxu0
      %642 = vmatprep.mubr.f32.mxu0 0.0
      %643 = vmatmul.mubr.f32.gmra.mrb[0].mxu0 %v341
      %v644 = vpop.f32.mrb[0].mxu0
      %v645 = vadd.f32 0.0, %v644
      %v646 = vpop.f32.mrb[0].mxu0
      %647 = vmatprep.mubr.f32.mxu0 0.0
      %648 = vmatmul.mubr.f32.gmra.mrb[0].mxu0 %v344
      %v649 = vpop.f32.mrb[0].mxu0
      %v650 = vadd.f32 0.0, %v649
      %v651 = vpop.f32.mrb[0].mxu0
      %652 = vmatprep.mubr.f32.mxu0 0.0
      %653 = vmatmul.mubr.f32.gmra.mrb[0].mxu0 %v347
      %v654 = vpop.f32.mrb[0].mxu0
      %v655 = vadd.f32 0.0, %v654
      %v656 = vpop.f32.mrb[0].mxu0
      %657 = vmatprep.mubr.f32.mxu0 0.0
      %658 = vmatmul.mubr.f32.gmra.mrb[0].mxu0 %v350
      %v659 = vpop.f32.mrb[0].mxu0
      %v660 = vadd.f32 0.0, %v659
      %v661 = vpop.f32.mrb[0].mxu0
      %662 = vmatprep.mubr.f32.mxu0 0.0
      %663 = vmatmul.mubr.f32.gmra.mrb[0].mxu0 %v353
      %v664 = vpop.f32.mrb[0].mxu0
      %v665 = vadd.f32 0.0, %v664
      %v666 = vpop.f32.mrb[0].mxu0
      %667 = vmatprep.mubr.f32.mxu0 0.0
      %668 = vmatmul.mubr.f32.gmra.mrb[0].mxu0 %v356
      %v669 = vpop.f32.mrb[0].mxu0
      %v670 = vadd.f32 0.0, %v669
      %v671 = vpop.f32.mrb[0].mxu0
      %672 = vmatprep.mubr.f32.mxu0 0.0
      %673 = vmatmul.mubr.f32.gmra.mrb[0].mxu0 %v359
      %v674 = vpop.f32.mrb[0].mxu0
      %v675 = vadd.f32 0.0, %v674
      %v676 = vpop.f32.mrb[0].mxu0
      %677 = vmatprep.mubr.f32.mxu0 0.0
      %678 = vmatmul.mubr.f32.gmra.mrb[0].mxu0 %v362
      %v679 = vpop.f32.mrb[0].mxu0
      %v680 = vadd.f32 0.0, %v679
      %v681 = vpop.f32.mrb[0].mxu0
      %682 = vmatprep.mubr.f32.mxu0 0.0
      %683 = vmatmul.mubr.f32.gmra.mrb[0].mxu0 %v365
      %v684 = vpop.f32.mrb[0].mxu0
      %v685 = vadd.f32 0.0, %v684
      %v686 = vpop.f32.mrb[0].mxu0
      %687 = vmatprep.mubr.f32.mxu0 0.0
      %688 = vmatmul.mubr.f32.gmra.mrb[0].mxu0 %v368
      %v689 = vpop.f32.mrb[0].mxu0
      %v690 = vadd.f32 0.0, %v689
      %v691 = vpop.f32.mrb[0].mxu0
      %692 = vmatprep.mubr.f32.mxu0 0.0
      %693 = vmatmul.mubr.f32.gmra.mrb[0].mxu0 %v371
      %v694 = vpop.f32.mrb[0].mxu0
      %v695 = vadd.f32 0.0, %v694
      %v696 = vpop.f32.mrb[0].mxu0
      %697 = vmatprep.mubr.f32.mxu0 0.0
      %698 = vmatmul.mubr.f32.gmra.mrb[0].mxu0 %v374
      %v699 = vpop.f32.mrb[0].mxu0
      %v700 = vadd.f32 0.0, %v699
      %v701 = vpop.f32.mrb[0].mxu0
      %702 = vmatprep.mubr.f32.mxu0 0.0
      %703 = vmatmul.mubr.f32.gmra.mrb[0].mxu0 %v377
      %v704 = vpop.f32.mrb[0].mxu0
      %v705 = vadd.f32 0.0, %v704
      %v706 = vpop.f32.mrb[0].mxu0
      %707 = vmatprep.mubr.f32.mxu0 0.0
      %708 = vmatmul.mubr.f32.gmra.mrb[0].mxu0 %v380
      %v709 = vpop.f32.mrb[0].mxu0
      %v710 = vadd.f32 0.0, %v709
      %v711 = vpop.f32.mrb[0].mxu0
      %712 = vmatprep.mubr.f32.mxu0 0.0
      %713 = vmatmul.mubr.f32.gmra.mrb[0].mxu0 %v383
      %v714 = vpop.f32.mrb[0].mxu0
      %v715 = vadd.f32 0.0, %v714
      %v716 = vpop.f32.mrb[0].mxu0
      %717 = vmatprep.mubr.f32.mxu0 0.0
      %718 = vmatmul.mubr.f32.gmra.mrb[0].mxu0 %v386
      %v719 = vpop.f32.mrb[0].mxu0
      %v720 = vadd.f32 0.0, %v719
      %v721 = vpop.f32.mrb[0].mxu0
      %722 = vmatprep.mubr.f32.mxu0 0.0
      %723 = vmatmul.mubr.f32.gmra.mrb[0].mxu0 %v389
      %v724 = vpop.f32.mrb[0].mxu0
      %v725 = vadd.f32 0.0, %v724
      %v726 = vpop.f32.mrb[0].mxu0
      %727 = vmatprep.mubr.f32.mxu0 0.0
      %728 = vmatmul.mubr.f32.gmra.mrb[0].mxu0 %v392
      %v729 = vpop.f32.mrb[0].mxu0
      %v730 = vadd.f32 0.0, %v729
      %v731 = vpop.f32.mrb[0].mxu0
      %732 = vmatprep.mubr.f32.mxu0 0.0
      %733 = vmatmul.mubr.f32.gmra.mrb[0].mxu0 %v395
      %v734 = vpop.f32.mrb[0].mxu0
      %v735 = vadd.f32 0.0, %v734
      %v736 = vpop.f32.mrb[0].mxu0
      %737 = vmatprep.mubr.f32.mxu0 0.0
      %738 = vmatmul.mubr.f32.gmra.mrb[0].mxu0 %v398
      %v739 = vpop.f32.mrb[0].mxu0
      %v740 = vadd.f32 0.0, %v739
      %v741 = vpop.f32.mrb[0].mxu0
      %742 = vmatprep.mubr.f32.mxu0 0.0
      %743 = vmatmul.mubr.f32.gmra.mrb[0].mxu0 %v401
      %v744 = vpop.f32.mrb[0].mxu0
      %v745 = vadd.f32 0.0, %v744
      %v746 = vpop.f32.mrb[0].mxu0
      %747 = vmatprep.mubr.f32.mxu0 0.0
      %748 = vmatmul.mubr.f32.gmra.mrb[0].mxu0 %v404
      %v749 = vpop.f32.mrb[0].mxu0
      %v750 = vadd.f32 0.0, %v749
      %v751 = vpop.f32.mrb[0].mxu0
      %752 = vmatprep.mubr.f32.mxu0 0.0
      %753 = vmatmul.mubr.f32.gmra.mrb[0].mxu0 %v407
      %v754 = vpop.f32.mrb[0].mxu0
      %v755 = vadd.f32 0.0, %v754
      %v756 = vpop.f32.mrb[0].mxu0
      %757 = vmatprep.mubr.f32.mxu0 0.0
      %758 = vmatmul.mubr.f32.gmra.mrb[0].mxu0 %v410
      %v759 = vpop.f32.mrb[0].mxu0
      %v760 = vadd.f32 0.0, %v759
      %v761 = vpop.f32.mrb[0].mxu0
      %762 = vmatprep.mubr.f32.mxu0 0.0
      %763 = vmatmul.mubr.f32.gmra.mrb[0].mxu0 %v413
      %v764 = vpop.f32.mrb[0].mxu0
      %v765 = vadd.f32 0.0, %v764
      %v766 = vpop.f32.mrb[0].mxu0
      %767 = vmatprep.mubr.f32.mxu0 0.0
      %768 = vmatmul.mubr.f32.gmra.mrb[0].mxu0 %v416
      %v769 = vpop.f32.mrb[0].mxu0
      %v770 = vadd.f32 0.0, %v769
      %v771 = vpop.f32.mrb[0].mxu0
      %772 = vmatprep.mubr.f32.mxu0 0.0
      %773 = vmatmul.mubr.f32.gmra.mrb[0].mxu0 %v419
      %v774 = vpop.f32.mrb[0].mxu0
      %v775 = vadd.f32 0.0, %v774
      %v776 = vpop.f32.mrb[0].mxu0
      %777 = vmatprep.mubr.f32.mxu0 0.0
      %778 = vmatmul.mubr.f32.gmra.mrb[0].mxu0 %v422
      %v779 = vpop.f32.mrb[0].mxu0
      %v780 = vadd.f32 0.0, %v779
      %v781 = vpop.f32.mrb[0].mxu0
      %782 = vmatprep.mubr.f32.mxu0 0.0
      %783 = vmatmul.mubr.f32.gmra.mrb[0].mxu0 %v425
      %v784 = vpop.f32.mrb[0].mxu0
      %v785 = vadd.f32 0.0, %v784
      %v786 = vpop.f32.mrb[0].mxu0
      %787 = vmatprep.mubr.f32.mxu0 0.0
      %788 = vmatmul.mubr.f32.gmra.mrb[0].mxu0 %v428
      %v789 = vpop.f32.mrb[0].mxu0
      %v790 = vadd.f32 0.0, %v789
      %v791 = vpop.f32.mrb[0].mxu0
      %792 = vmatprep.mubr.f32.mxu0 0.0
      %793 = vmatmul.mubr.f32.gmra.mrb[0].mxu0 %v431
      %v794 = vpop.f32.mrb[0].mxu0
      %v795 = vadd.f32 0.0, %v794
      %v796 = vpop.f32.mrb[0].mxu0
      %797 = vmatprep.mubr.f32.mxu0 0.0
      %798 = vmatmul.mubr.f32.gmra.mrb[0].mxu0 %v434
      %v799 = vpop.f32.mrb[0].mxu0
      %v800 = vadd.f32 0.0, %v799
      %v801 = vpop.f32.mrb[0].mxu0
      %802 = vmatprep.mubr.f32.mxu0 0.0
      %803 = vmatmul.mubr.f32.gmra.mrb[0].mxu0 %v437
      %v804 = vpop.f32.mrb[0].mxu0
      %v805 = vadd.f32 0.0, %v804
      %v806 = vpop.f32.mrb[0].mxu0
      %807 = vmatprep.mubr.f32.mxu0 0.0
      %808 = vmatmul.mubr.f32.gmra.mrb[0].mxu0 %v440
      %v809 = vpop.f32.mrb[0].mxu0
      %v810 = vadd.f32 0.0, %v809
      %v811 = vpop.f32.mrb[0].mxu0
      %812 = vmatprep.mubr.f32.mxu0 0.0
      %813 = vmatmul.mubr.f32.gmra.mrb[0].mxu0 %v443
      %v814 = vpop.f32.mrb[0].mxu0
      %v815 = vadd.f32 0.0, %v814
      %v816 = vpop.f32.mrb[0].mxu0
      %817 = vmatprep.mubr.f32.mxu0 0.0
      %818 = vmatmul.mubr.f32.gmra.mrb[0].mxu0 %v446
      %v819 = vpop.f32.mrb[0].mxu0
      %v820 = vadd.f32 0.0, %v819
      %v821 = vpop.f32.mrb[0].mxu0
      %822 = vmatprep.mubr.f32.mxu0 0.0
      %823 = vmatmul.mubr.f32.gmra.mrb[0].mxu0 %v449
      %v824 = vpop.f32.mrb[0].mxu0
      %v825 = vadd.f32 0.0, %v824
      %v826 = vpop.f32.mrb[0].mxu0
      %827 = vmatprep.mubr.f32.mxu0 0.0
      %828 = vmatmul.mubr.f32.gmra.mrb[0].mxu0 %v452
      %v829 = vpop.f32.mrb[0].mxu0
      %v830 = vadd.f32 0.0, %v829
      %v831 = vpop.f32.mrb[0].mxu0
      %832 = vmatprep.mubr.f32.mxu0 0.0
      %833 = vmatmul.mubr.f32.gmra.mrb[0].mxu0 %v455
      %v834 = vpop.f32.mrb[0].mxu0
      %v835 = vadd.f32 0.0, %v834
      %v836 = vpop.f32.mrb[0].mxu0
      %837 = vmatprep.mubr.f32.mxu0 0.0
      %838 = vmatmul.mubr.f32.gmra.mrb[0].mxu0 %v458
      %v839 = vpop.f32.mrb[0].mxu0
      %v840 = vadd.f32 0.0, %v839
      %v841 = vpop.f32.mrb[0].mxu0
      %842 = vmatprep.mubr.f32.mxu0 0.0
      %843 = vmatmul.mubr.f32.gmra.mrb[0].mxu0 %v461
      %v844 = vpop.f32.mrb[0].mxu0
      %v845 = vadd.f32 0.0, %v844
      %v846 = vpop.f32.mrb[0].mxu0
      %847 = vdwg.mxu0
      %v848 = vmax.f32 %v530, %v570
      %v849 = vmax.f32 %v535, %v575
      %v850 = vmax.f32 %v540, %v580
      %v851 = vmax.f32 %v545, %v585
      %v852 = vmax.f32 %v550, %v590
      %v853 = vmax.f32 %v555, %v595
      %v854 = vmax.f32 %v560, %v600
      %v855 = vmax.f32 %v565, %v605
      %v856 = vmax.f32 %v848, %v610
      %v857 = vmax.f32 %v849, %v615
      %v858 = vmax.f32 %v850, %v620
      %v859 = vmax.f32 %v851, %v625
      %v860 = vmax.f32 %v852, %v630
      %v861 = vmax.f32 %v853, %v635
      %v862 = vmax.f32 %v854, %v640
      %v863 = vmax.f32 %v855, %v645
      %v864 = vmax.f32 %v856, %v650
      %v865 = vmax.f32 %v857, %v655
      %v866 = vmax.f32 %v858, %v660
      %v867 = vmax.f32 %v859, %v665
      %v868 = vmax.f32 %v860, %v670
      %v869 = vmax.f32 %v861, %v675
      %v870 = vmax.f32 %v862, %v680
      %v871 = vmax.f32 %v863, %v685
      %v872 = vmax.f32 %v864, %v690
      %v873 = vmax.f32 %v865, %v695
      %v874 = vmax.f32 %v866, %v700
      %v875 = vmax.f32 %v867, %v705
      %v876 = vmax.f32 %v868, %v710
      %v877 = vmax.f32 %v869, %v715
      %v878 = vmax.f32 %v870, %v720
      %v879 = vmax.f32 %v871, %v725
      %v880 = vmax.f32 %v872, %v730
      %v881 = vmax.f32 %v873, %v735
      %v882 = vmax.f32 %v874, %v740
      %v883 = vmax.f32 %v875, %v745
      %v884 = vmax.f32 %v876, %v750
      %v885 = vmax.f32 %v877, %v755
      %v886 = vmax.f32 %v878, %v760
      %v887 = vmax.f32 %v879, %v765
      %v888 = vmax.f32 %v880, %v770
      %v889 = vmax.f32 %v881, %v775
      %v890 = vmax.f32 %v882, %v780
      %v891 = vmax.f32 %v883, %v785
      %v892 = vmax.f32 %v884, %v790
      %v893 = vmax.f32 %v885, %v795
      %v894 = vmax.f32 %v886, %v800
      %v895 = vmax.f32 %v887, %v805
      %v896 = vmax.f32 %v888, %v810
      %v897 = vmax.f32 %v889, %v815
      %v898 = vmax.f32 %v890, %v820
      %v899 = vmax.f32 %v891, %v825
      %v900 = vmax.f32 %v892, %v830
      %v901 = vmax.f32 %v893, %v835
      %v902 = vmax.f32 %v894, %v840
      %v903 = vmax.f32 %v895, %v845
      %v904 = vld [vmem:[%s2] sm:$0xff]
      %v905 = vld [vmem:[%s2 + $0x8] sm:$0xff]
      %v906 = vld [vmem:[%s2 + $0x10] sm:$0xff]
      %v907 = vld [vmem:[%s2 + $0x18] sm:$0xff]
      %v908 = vld [vmem:[%s2 + $0x20] sm:$0xff]
      %v909 = vld [vmem:[%s2 + $0x28] sm:$0xff]
      %v910 = vld [vmem:[%s2 + $0x30] sm:$0xff]
      %v911 = vld [vmem:[%s2 + $0x38] sm:$0xff]
      %913 = vset.pattern.permute.xlu0 0
      %914 = vperm.xlu0 %913, %v904
      %v915 = vpop.permute.xlu0 %914
      %918 = vset.pattern.permute.xlu0 0
      %919 = vperm.xlu0 %918, %v905
      %v920 = vpop.permute.xlu0 %919
      %923 = vset.pattern.permute.xlu0 0
      %924 = vperm.xlu0 %923, %v906
      %v925 = vpop.permute.xlu0 %924
      %928 = vset.pattern.permute.xlu0 0
      %929 = vperm.xlu0 %928, %v907
      %v930 = vpop.permute.xlu0 %929
      %933 = vset.pattern.permute.xlu0 0
      %934 = vperm.xlu0 %933, %v908
      %v935 = vpop.permute.xlu0 %934
      %938 = vset.pattern.permute.xlu0 0
      %939 = vperm.xlu0 %938, %v909
      %v940 = vpop.permute.xlu0 %939
      %943 = vset.pattern.permute.xlu0 0
      %944 = vperm.xlu0 %943, %v910
      %v945 = vpop.permute.xlu0 %944
      %948 = vset.pattern.permute.xlu0 0
      %949 = vperm.xlu0 %948, %v911
      %v950 = vpop.permute.xlu0 %949
      %v952 = vadd.f32 %v896, %v915
      %v953 = vadd.f32 %v897, %v920
      %v954 = vadd.f32 %v898, %v925
      %v955 = vadd.f32 %v899, %v930
      %v956 = vadd.f32 %v900, %v935
      %v957 = vadd.f32 %v901, %v940
      %v958 = vadd.f32 %v902, %v945
      %v959 = vadd.f32 %v903, %v950
      %v960 = vmax.f32 %v952, 0.0
      %v961 = vmax.f32 %v953, 0.0
      %v962 = vmax.f32 %v954, 0.0
      %v963 = vmax.f32 %v955, 0.0
      %v964 = vmax.f32 %v956, 0.0
      %v965 = vmax.f32 %v957, 0.0
      %v966 = vmax.f32 %v958, 0.0
      %v967 = vmax.f32 %v959, 0.0
      %968 = vst [vmem:[%s201] sm:$0xff] %v960
      %969 = vst [vmem:[%s201 + $0x8] sm:$0xff] %v961
      %970 = vst [vmem:[%s201 + $0x10] sm:$0xff] %v962
      %971 = vst [vmem:[%s201 + $0x18] sm:$0xff] %v963
      %972 = vst [vmem:[%s201 + $0x20] sm:$0xff] %v964
      %973 = vst [vmem:[%s201 + $0x28] sm:$0xff] %v965
      %974 = vst [vmem:[%s201 + $0x30] sm:$0xff] %v966
      %975 = vst [vmem:[%s201 + $0x38] sm:$0xff] %v967
      %p976 = scmp.lt.s32.totalorder %s18, 1
      %s977 = scalar_select %p976, %s18, 1
      %p978 = scmp.lt.s32.totalorder %s19, 0
      %s979 = scalar_select %p978, %s19, 0
      %s980 = smul.addr %s977, 8
      %s981 = sadd.s32 %s979, %s980
      %s982 = smul.addr %s981, 8
      %s983 = scalar_lea.vmem %s3, %s982
      // Predicated region
      $region33: #{_lambda_.3} parent=31 // pred_check
        %p984 = pneg %p116
      $region34: #{_lambda_.3} parent=31 // pred_check_branch
        %986 = sbr.rel (%p984) target = $region36
      $region35: #{_lambda_.3} parent=31 // pred_region
        _
      $region36: #{_lambda_.3} parent=31 // pred_fallthru
        _
    $region32: #{_lambda_.3} parent=5 // pred_fallthru
      _
    %p987 = scmp.le.s32.totalorder 2, %s9
    // Predicated region
    $region37: #{_lambda_.3} parent=5 // pred_check
      %p988 = pneg %p987
    $region38: #{_lambda_.3} parent=5 // pred_check_branch
      %990 = sbr.rel (%p988) target = $region40
    $region39: #{_lambda_.3} parent=5 // pred_region
      %s991 = ssub.s32 %s9, 2
      // Predicated region
      $region41: #{_lambda_.3} parent=39 // pred_check
        %p992 = pneg %p122
      $region42: #{_lambda_.3} parent=39 // pred_check_branch
        %994 = sbr.rel (%p992) target = $region44
      $region43: #{_lambda_.3} parent=39 // pred_region
        %p995 = scmp.lt.s32.totalorder %s20, 1
        %s996 = scalar_select %p995, %s20, 1
        %p997 = scmp.lt.s32.totalorder %s21, 0
        %s998 = scalar_select %p997, %s21, 0
        %s999 = smul.addr %s996, 8
        %s1000 = sadd.s32 %s998, %s999
        %s1001 = smul.addr %s1000, 8
        %s1002 = scalar_lea.vmem %s3, %s1001
      $region44: #{_lambda_.3} parent=39 // pred_fallthru
        _
    $region40: #{_lambda_.3} parent=5 // pred_fallthru
      _
  $region6: #{_lambda_.3} parent=0 // loop_footer
    %s13 = sadd.s32 1, %s9
  $region7: #{_lambda_.3} parent=0 // loop_footer_branch
    %8 = sbr.rel target = $region3
  $region8: #{_lambda_.3} parent=0 // loop_exit
    _

</llo_original>
